<compile_context>
chip_gen: v7x
topology: tpu7x:2x2x1
jax: 0.10.0
libtpu: 0.0.40
codegen_flags: <defaults>
</compile_context>

<pallas_src>
import numpy as np
import jax
import jax.numpy as jnp
from jax import lax
from jax.experimental import pallas as pl
from jax.experimental.pallas import tpu as pltpu

DEPTH = 2     # args.emb_depth
FEATS = 2     # node features (2-D coordinates)
UNITS = 32    # args.net_units
EPS = 1e-5


# ----------------------------- fused Pallas kernel -----------------------------

def _bn_relu(y, gamma, beta):
    # Training-mode BatchNorm1d: mean / biased variance over the FULL row axis.
    # NOTE: this kernel is intentionally un-gridded over rows; the reduction
    # must stay over all N (or E) rows -- do NOT add row tiling here.
    mean = jnp.mean(y, axis=0, keepdims=True)
    var = jnp.mean(jnp.square(y - mean), axis=0, keepdims=True)
    z = (y - mean) * lax.rsqrt(var + EPS) * gamma + beta
    return jnp.maximum(z, 0.0)


def _fused_net_kernel(
    x_ref, ea_ref,                        # [N, FEATS], [E, 1]     (unpadded)
    gs_ref, gd_ref, mask_ref,             # [E,N] bf16, [E,N] bf16, [P*B,E] f32
    wv0_ref, bv0_ref, we0_ref, be0_ref,   # [FEATS,U],[1,U],[1,U],[1,U]
    wv_ref, bv_ref,                       # [DEPTH,U,4U], [DEPTH,1,4U]
    we_ref, be_ref,                       # [DEPTH,U,U],  [DEPTH,1,U]
    vg_ref, vb_ref, eg_ref, eb_ref,       # [DEPTH,1,U] each (BN gamma/beta)
    edge_out_ref, pool_out_ref,           # [E,U], [P*B,U]
):
    f32 = jnp.float32

    # v_lin0 / e_lin0 as VPU broadcast FMAs (2- and 1-feature contractions are
    # cheaper on the VPU than zero-padded MXU matmuls).
    x = bv0_ref[...]
    for f in range(FEATS):                       # static unroll (FEATS = 2)
        x = x + x_ref[:, f:f + 1] * wv0_ref[f:f + 1, :]
    x = jnp.maximum(x, 0.0)                                          # [N, U]
    w = jnp.maximum(ea_ref[...] * we0_ref[...] + be0_ref[...], 0.0)  # [E, U]

    # One-hot gather matrices arrive as bf16 (exact 0/1), promote once.
    gs = gs_ref[...].astype(f32)     # [E, N]: Gs[e, n] = (src[e] == n)
    gd = gd_ref[...].astype(f32)     # [E, N]: Gd[e, n] = (dst[e] == n)

    for i in range(DEPTH):               # static unroll (DEPTH = 2)
        x0, w0 = x, w

        # Fused 4-way node linear: [N,32] @ [32,128] -> lane-dense [N,128].
        xv = jnp.dot(x0, wv_ref[i], preferred_element_type=f32) + bv_ref[i]
        w1 = jnp.dot(w0, we_ref[i], preferred_element_type=f32) + be_ref[i]

        x1 = xv[:, 0 * UNITS:1 * UNITS]

        # Gather the full 128-wide node features once per direction, then
        # lane-slice (2 wide gather matmuls instead of 3 narrow ones).
        x_dst = jnp.dot(gd, xv, preferred_element_type=f32)   # xv[edge_index[1]]
        x_src = jnp.dot(gs, xv, preferred_element_type=f32)   # xv[edge_index[0]]
        x2_dst = x_dst[:, 1 * UNITS:2 * UNITS]
        x3_src = x_src[:, 2 * UNITS:3 * UNITS]
        x4_dst = x_dst[:, 3 * UNITS:4 * UNITS]

        # Message + scatter-sum aggregation. The scatter-sum over src nodes is
        # Gs^T @ msg, expressed without a materialized transpose by
        # contracting dim 0 of both operands on the MXU.
        msg = jax.nn.sigmoid(w0) * x2_dst
        agg = lax.dot_general(gs, msg, (((0,), (0,)), ((), ())),
                              preferred_element_type=f32)      # [N, U]

        x = x0 + _bn_relu(x1 + agg, vg_ref[i], vb_ref[i])
        w = w0 + _bn_relu(w1 + x3_src + x4_dst, eg_ref[i], eb_ref[i])

    edge_out_ref[...] = w

    # Masked mean pooling: mask rows are pre-scaled by 1/max(cnt,1) on the
    # host, so the pooled (position, batch) means are a single matmul.
    pool_out_ref[...] = jnp.dot(mask_ref[...], w, preferred_element_type=f32)


def build_fused_forward(P, B):
    """Returns a jitted forward(params, x, edge_attr, structs)."""

    def forward(params, x, edge_attr, structs):
        E = edge_attr.shape[0]
        gs, gd, mask = structs

        edge_emb, pooled = pl.pallas_call(
            _fused_net_kernel,
            out_shape=(
                jax.ShapeDtypeStruct((E, UNITS), jnp.float32),
                jax.ShapeDtypeStruct((P * B, UNITS), jnp.float32),
            ),
            compiler_params=pltpu.CompilerParams(
                vmem_limit_bytes=32 * 1024 * 1024),
        )(x, edge_attr, gs, gd, mask,
          params["wv0"], params["bv0"], params["we0"], params["be0"],
          params["Wv"], params["bv"], params["We"], params["be"],
          params["vg"], params["vb"], params["eg"], params["eb"])

        graph_emb = pooled.reshape(P, B, UNITS)
        return graph_emb, edge_emb

    return jax.jit(forward)


# --------------------------- parameter handling ---------------------------

def init_linear(key, fan_in, fan_out):
    kw, kb = jax.random.split(key)
    bound = 1.0 / np.sqrt(fan_in)
    w = jax.random.uniform(kw, (fan_in, fan_out), jnp.float32, -bound, bound)
    b = jax.random.uniform(kb, (fan_out,), jnp.float32, -bound, bound)
    return w, b


def init_params(key):
    keys = iter(jax.random.split(key, 2 + 5 * DEPTH))
    wv0, bv0 = init_linear(next(keys), FEATS, UNITS)
    we0, be0 = init_linear(next(keys), 1, UNITS)

    Wv_layers, bv_layers, We_layers, be_layers = [], [], [], []
    for _ in range(DEPTH):
        ws, bs = [], []
        for _ in range(4):                       # v_lins1..4
            w, b = init_linear(next(keys), UNITS, UNITS)
            ws.append(w)
            bs.append(b)
        we, be = init_linear(next(keys), UNITS, UNITS)
        Wv_layers.append(jnp.concatenate(ws, axis=1))        # [U, 4U]
        bv_layers.append(jnp.concatenate(bs, axis=0)[None])  # [1, 4U]
        We_layers.append(we)                                 # [U, U]
        be_layers.append(be[None])                           # [1, U]

    return {
        "wv0": wv0,                                          # [FEATS, U]
        "bv0": bv0[None],                                    # [1, U]
        "we0": we0,                                          # [1, U]
        "be0": be0[None],                                    # [1, U]
        "Wv": jnp.stack(Wv_layers),                          # [DEPTH, U, 4U]
        "bv": jnp.stack(bv_layers),                          # [DEPTH, 1, 4U]
        "We": jnp.stack(We_layers),                          # [DEPTH, U, U]
        "be": jnp.stack(be_layers),                          # [DEPTH, 1, U]
        "vg": jnp.ones((DEPTH, 1, UNITS), jnp.float32),
        "vb": jnp.zeros((DEPTH, 1, UNITS), jnp.float32),
        "eg": jnp.ones((DEPTH, 1, UNITS), jnp.float32),
        "eb": jnp.zeros((DEPTH, 1, UNITS), jnp.float32),
    }


# --------------------- static topology structures (built once) ---------------------

def precompute_structures(src, dst, batch, position, num_nodes):
    """One-time host construction of gather one-hots and the pooling mask."""
    src = np.asarray(src)
    dst = np.asarray(dst)
    batch = np.asarray(batch)
    position = np.asarray(position)
    nodes = np.arange(num_nodes)

    Gs = (src[:, None] == nodes[None, :]).astype(np.float32)    # [E, N] gather x[src]
    Gd = (dst[:, None] == nodes[None, :]).astype(np.float32)    # [E, N] gather x[dst]

    edge_batch = batch[src]
    edge_pos = position[src]
    uniq_pos = np.unique(position)     # sorted
    uniq_bat = np.unique(batch)        # sorted
    P, B = len(uniq_pos), len(uniq_bat)
    pos_mask = edge_pos[None, :] == uniq_pos[:, None]            # [P, E]
    bat_mask = edge_batch[None, :] == uniq_bat[:, None]          # [B, E]
    mask = (pos_mask[:, None, :] & bat_mask[None, :, :]).reshape(P * B, -1)
    mask = mask.astype(np.float32)
    # Fold the mean normalization into the static mask (empty groups -> 0).
    cnt = mask.sum(axis=1, keepdims=True)
    mask = mask / np.maximum(cnt, 1.0)

    # Gather one-hots are exact in bf16 (values 0/1) -> halve their DMA bytes.
    structs = (jnp.asarray(Gs, dtype=jnp.bfloat16),
               jnp.asarray(Gd, dtype=jnp.bfloat16),
               jnp.asarray(mask, dtype=jnp.float32))
    return structs, P, B


# --------------------------------- main ------------------------------------

if __name__ == "__main__":
    key = jax.random.PRNGKey(0)
    pkey, xkey = jax.random.split(key)
    params = init_params(pkey)

    n_graphs = 2       # batch size (number of graphs)
    nodes_per = 8      # nodes per graph -> seq_len = 8
    N = n_graphs * nodes_per

    # Node coordinates in [0, 1)^2
    x = jax.random.uniform(xkey, (N, FEATS), jnp.float32)

    # Fully connected (no self-loop) edges within each graph.
    srcs, dsts = [], []
    for g in range(n_graphs):
        for i in range(nodes_per):
            for j in range(nodes_per):
                if i != j:
                    srcs.append(g * nodes_per + i)
                    dsts.append(g * nodes_per + j)
    srcs = np.asarray(srcs, np.int32)
    dsts = np.asarray(dsts, np.int32)

    xnp = np.asarray(x)
    edge_attr = jnp.asarray(
        np.linalg.norm(xnp[srcs] - xnp[dsts], axis=1, keepdims=True),
        dtype=jnp.float32)                                          # [E, 1]

    batch = np.repeat(np.arange(n_graphs), nodes_per).astype(np.int32)
    position = np.tile(np.arange(nodes_per), n_graphs).astype(np.int32)

    # Static-topology structures built once, hoisted out of the hot path.
    structs, P, B = precompute_structures(srcs, dsts, batch, position, N)
    forward = build_fused_forward(P, B)

    graph_emb, edge_emb = forward(params, x, edge_attr, structs)
    jax.block_until_ready((graph_emb, edge_emb))

    assert graph_emb.shape == (nodes_per, n_graphs, UNITS)
    assert edge_emb.shape == (srcs.shape[0], UNITS)
    print("KERNEL_OK")
</pallas_src>

<mosaic_0001>
module attributes {stable_mosaic.version = 11 : i64} {
  func.func @_fused_net_kernel(%arg0: memref<16x2xf32, #tpu.memory_space<vmem>>, %arg1: memref<112x1xf32, #tpu.memory_space<vmem>>, %arg2: memref<112x16xbf16, #tpu.memory_space<vmem>>, %arg3: memref<112x16xbf16, #tpu.memory_space<vmem>>, %arg4: memref<16x112xf32, #tpu.memory_space<vmem>>, %arg5: memref<2x32xf32, #tpu.memory_space<vmem>>, %arg6: memref<1x32xf32, #tpu.memory_space<vmem>>, %arg7: memref<1x32xf32, #tpu.memory_space<vmem>>, %arg8: memref<1x32xf32, #tpu.memory_space<vmem>>, %arg9: memref<2x32x128xf32, #tpu.memory_space<vmem>>, %arg10: memref<2x1x128xf32, #tpu.memory_space<vmem>>, %arg11: memref<2x32x32xf32, #tpu.memory_space<vmem>>, %arg12: memref<2x1x32xf32, #tpu.memory_space<vmem>>, %arg13: memref<2x1x32xf32, #tpu.memory_space<vmem>>, %arg14: memref<2x1x32xf32, #tpu.memory_space<vmem>>, %arg15: memref<2x1x32xf32, #tpu.memory_space<vmem>>, %arg16: memref<2x1x32xf32, #tpu.memory_space<vmem>>, %arg17: memref<112x32xf32, #tpu.memory_space<vmem>>, %arg18: memref<16x32xf32, #tpu.memory_space<vmem>>) attributes {dimension_semantics = [], scalar_prefetch = 0 : i64, scratch_operands = 0 : i64, tpu.core_type = #tpu.core_type<tc>} {
    %c0 = arith.constant 0 : index
    %c0_0 = arith.constant 0 : index
    %0 = vector.load %arg6[%c0, %c0_0] : memref<1x32xf32, #tpu.memory_space<vmem>>, vector<1x32xf32>
    %c0_1 = arith.constant 0 : index
    %c0_2 = arith.constant 0 : index
    %1 = vector.load %arg0[%c0_1, %c0_2] : memref<16x2xf32, #tpu.memory_space<vmem>>, vector<16x1xf32>
    %c0_3 = arith.constant 0 : index
    %c0_4 = arith.constant 0 : index
    %2 = vector.load %arg5[%c0_3, %c0_4] : memref<2x32xf32, #tpu.memory_space<vmem>>, vector<1x32xf32>
    %3 = vector.broadcast %1 : vector<16x1xf32> to vector<16x32xf32>
    %4 = vector.broadcast %2 : vector<1x32xf32> to vector<16x32xf32>
    %5 = arith.mulf %3, %4 : vector<16x32xf32>
    %6 = vector.broadcast %0 : vector<1x32xf32> to vector<16x32xf32>
    %7 = arith.addf %6, %5 : vector<16x32xf32>
    %c0_5 = arith.constant 0 : index
    %c1 = arith.constant 1 : index
    %8 = vector.load %arg0[%c0_5, %c1] : memref<16x2xf32, #tpu.memory_space<vmem>>, vector<16x1xf32>
    %c1_6 = arith.constant 1 : index
    %c0_7 = arith.constant 0 : index
    %9 = vector.load %arg5[%c1_6, %c0_7] : memref<2x32xf32, #tpu.memory_space<vmem>>, vector<1x32xf32>
    %10 = vector.broadcast %8 : vector<16x1xf32> to vector<16x32xf32>
    %11 = vector.broadcast %9 : vector<1x32xf32> to vector<16x32xf32>
    %12 = arith.mulf %10, %11 : vector<16x32xf32>
    %13 = arith.addf %7, %12 : vector<16x32xf32>
    %cst = arith.constant 0.000000e+00 : f32
    %14 = vector.broadcast %cst : f32 to vector<16x32xf32>
    %15 = arith.maximumf %13, %14 : vector<16x32xf32>
    %c0_8 = arith.constant 0 : index
    %c0_9 = arith.constant 0 : index
    %16 = vector.load %arg1[%c0_8, %c0_9] : memref<112x1xf32, #tpu.memory_space<vmem>>, vector<112x1xf32>
    %c0_10 = arith.constant 0 : index
    %c0_11 = arith.constant 0 : index
    %17 = vector.load %arg7[%c0_10, %c0_11] : memref<1x32xf32, #tpu.memory_space<vmem>>, vector<1x32xf32>
    %18 = vector.broadcast %16 : vector<112x1xf32> to vector<112x32xf32>
    %19 = vector.broadcast %17 : vector<1x32xf32> to vector<112x32xf32>
    %20 = arith.mulf %18, %19 : vector<112x32xf32>
    %c0_12 = arith.constant 0 : index
    %c0_13 = arith.constant 0 : index
    %21 = vector.load %arg8[%c0_12, %c0_13] : memref<1x32xf32, #tpu.memory_space<vmem>>, vector<1x32xf32>
    %22 = vector.broadcast %21 : vector<1x32xf32> to vector<112x32xf32>
    %23 = arith.addf %20, %22 : vector<112x32xf32>
    %cst_14 = arith.constant 0.000000e+00 : f32
    %24 = vector.broadcast %cst_14 : f32 to vector<112x32xf32>
    %25 = arith.maximumf %23, %24 : vector<112x32xf32>
    %c0_15 = arith.constant 0 : index
    %c0_16 = arith.constant 0 : index
    %26 = vector.load %arg2[%c0_15, %c0_16] : memref<112x16xbf16, #tpu.memory_space<vmem>>, vector<112x16xbf16>
    %27 = arith.extf %26 : vector<112x16xbf16> to vector<112x16xf32>
    %c0_17 = arith.constant 0 : index
    %c0_18 = arith.constant 0 : index
    %28 = vector.load %arg3[%c0_17, %c0_18] : memref<112x16xbf16, #tpu.memory_space<vmem>>, vector<112x16xbf16>
    %29 = arith.extf %28 : vector<112x16xbf16> to vector<112x16xf32>
    %c0_19 = arith.constant 0 : index
    %c0_20 = arith.constant 0 : index
    %c0_21 = arith.constant 0 : index
    %30 = vector.load %arg9[%c0_19, %c0_20, %c0_21] : memref<2x32x128xf32, #tpu.memory_space<vmem>>, vector<1x32x128xf32>
    %31 = vector.shape_cast %30 : vector<1x32x128xf32> to vector<32x128xf32>
    %cst_22 = arith.constant dense<0.000000e+00> : vector<16x128xf32>
    %32 = tpu.matmul %15, %31, %cst_22 {dimension_numbers = #tpu.dot_dimension_numbers<[1], [0], [0], [1], [0, 0, 1, 1], [], []>} : vector<16x32xf32>, vector<32x128xf32>, vector<16x128xf32> -> vector<16x128xf32>
    %c0_23 = arith.constant 0 : index
    %c0_24 = arith.constant 0 : index
    %c0_25 = arith.constant 0 : index
    %33 = vector.load %arg10[%c0_23, %c0_24, %c0_25] : memref<2x1x128xf32, #tpu.memory_space<vmem>>, vector<1x1x128xf32>
    %34 = vector.shape_cast %33 : vector<1x1x128xf32> to vector<1x128xf32>
    %35 = vector.broadcast %34 : vector<1x128xf32> to vector<16x128xf32>
    %36 = arith.addf %32, %35 : vector<16x128xf32>
    %c0_26 = arith.constant 0 : index
    %c0_27 = arith.constant 0 : index
    %c0_28 = arith.constant 0 : index
    %37 = vector.load %arg11[%c0_26, %c0_27, %c0_28] : memref<2x32x32xf32, #tpu.memory_space<vmem>>, vector<1x32x32xf32>
    %38 = vector.shape_cast %37 : vector<1x32x32xf32> to vector<32x32xf32>
    %cst_29 = arith.constant dense<0.000000e+00> : vector<112x32xf32>
    %39 = tpu.matmul %25, %38, %cst_29 {dimension_numbers = #tpu.dot_dimension_numbers<[1], [0], [0], [1], [0, 0, 1, 1], [], []>} : vector<112x32xf32>, vector<32x32xf32>, vector<112x32xf32> -> vector<112x32xf32>
    %c0_30 = arith.constant 0 : index
    %c0_31 = arith.constant 0 : index
    %c0_32 = arith.constant 0 : index
    %40 = vector.load %arg12[%c0_30, %c0_31, %c0_32] : memref<2x1x32xf32, #tpu.memory_space<vmem>>, vector<1x1x32xf32>
    %41 = vector.shape_cast %40 : vector<1x1x32xf32> to vector<1x32xf32>
    %42 = vector.broadcast %41 : vector<1x32xf32> to vector<112x32xf32>
    %43 = arith.addf %39, %42 : vector<112x32xf32>
    %44 = vector.extract_strided_slice %36 {offsets = [0, 0], sizes = [16, 32], strides = [1, 1]} : vector<16x128xf32> to vector<16x32xf32>
    %cst_33 = arith.constant dense<0.000000e+00> : vector<112x128xf32>
    %45 = tpu.matmul %29, %36, %cst_33 {dimension_numbers = #tpu.dot_dimension_numbers<[1], [0], [0], [1], [0, 0, 1, 1], [], []>} : vector<112x16xf32>, vector<16x128xf32>, vector<112x128xf32> -> vector<112x128xf32>
    %cst_34 = arith.constant dense<0.000000e+00> : vector<112x128xf32>
    %46 = tpu.matmul %27, %36, %cst_34 {dimension_numbers = #tpu.dot_dimension_numbers<[1], [0], [0], [1], [0, 0, 1, 1], [], []>} : vector<112x16xf32>, vector<16x128xf32>, vector<112x128xf32> -> vector<112x128xf32>
    %47 = vector.extract_strided_slice %45 {offsets = [0, 32], sizes = [112, 32], strides = [1, 1]} : vector<112x128xf32> to vector<112x32xf32>
    %48 = vector.extract_strided_slice %46 {offsets = [0, 64], sizes = [112, 32], strides = [1, 1]} : vector<112x128xf32> to vector<112x32xf32>
    %49 = vector.extract_strided_slice %45 {offsets = [0, 96], sizes = [112, 32], strides = [1, 1]} : vector<112x128xf32> to vector<112x32xf32>
    %50 = arith.negf %25 : vector<112x32xf32>
    %51 = math.exp %50 : vector<112x32xf32>
    %cst_35 = arith.constant 1.000000e+00 : f32
    %52 = vector.broadcast %cst_35 : f32 to vector<112x32xf32>
    %53 = arith.addf %52, %51 : vector<112x32xf32>
    %54 = arith.divf %52, %53 : vector<112x32xf32>
    %55 = arith.mulf %54, %47 : vector<112x32xf32>
    %cst_36 = arith.constant dense<0.000000e+00> : vector<16x32xf32>
    %56 = tpu.matmul %27, %55, %cst_36 {dimension_numbers = #tpu.dot_dimension_numbers<[0], [0], [1], [1], [0, 1, 1, 1], [], []>} : vector<112x16xf32>, vector<112x32xf32>, vector<16x32xf32> -> vector<16x32xf32>
    %57 = arith.addf %44, %56 : vector<16x32xf32>
    %c0_37 = arith.constant 0 : index
    %c0_38 = arith.constant 0 : index
    %c0_39 = arith.constant 0 : index
    %58 = vector.load %arg13[%c0_37, %c0_38, %c0_39] : memref<2x1x32xf32, #tpu.memory_space<vmem>>, vector<1x1x32xf32>
    %59 = vector.shape_cast %58 : vector<1x1x32xf32> to vector<1x32xf32>
    %c0_40 = arith.constant 0 : index
    %c0_41 = arith.constant 0 : index
    %c0_42 = arith.constant 0 : index
    %60 = vector.load %arg14[%c0_40, %c0_41, %c0_42] : memref<2x1x32xf32, #tpu.memory_space<vmem>>, vector<1x1x32xf32>
    %61 = vector.shape_cast %60 : vector<1x1x32xf32> to vector<1x32xf32>
    %cst_43 = arith.constant dense<0.000000e+00> : vector<32xf32>
    %62 = vector.multi_reduction <add>, %57, %cst_43 [0] : vector<16x32xf32> to vector<32xf32>
    %63 = vector.shape_cast %62 : vector<32xf32> to vector<1x32xf32>
    %cst_44 = arith.constant 1.600000e+01 : f32
    %64 = vector.broadcast %cst_44 : f32 to vector<1x32xf32>
    %65 = arith.divf %63, %64 : vector<1x32xf32>
    %66 = vector.broadcast %65 : vector<1x32xf32> to vector<16x32xf32>
    %67 = arith.subf %57, %66 : vector<16x32xf32>
    %68 = arith.mulf %67, %67 : vector<16x32xf32>
    %cst_45 = arith.constant dense<0.000000e+00> : vector<32xf32>
    %69 = vector.multi_reduction <add>, %68, %cst_45 [0] : vector<16x32xf32> to vector<32xf32>
    %70 = vector.shape_cast %69 : vector<32xf32> to vector<1x32xf32>
    %cst_46 = arith.constant 1.600000e+01 : f32
    %71 = vector.broadcast %cst_46 : f32 to vector<1x32xf32>
    %72 = arith.divf %70, %71 : vector<1x32xf32>
    %73 = vector.broadcast %65 : vector<1x32xf32> to vector<16x32xf32>
    %74 = arith.subf %57, %73 : vector<16x32xf32>
    %cst_47 = arith.constant 9.99999974E-6 : f32
    %75 = vector.broadcast %cst_47 : f32 to vector<1x32xf32>
    %76 = arith.addf %72, %75 : vector<1x32xf32>
    %77 = math.rsqrt %76 : vector<1x32xf32>
    %78 = vector.broadcast %77 : vector<1x32xf32> to vector<16x32xf32>
    %79 = arith.mulf %74, %78 : vector<16x32xf32>
    %80 = vector.broadcast %59 : vector<1x32xf32> to vector<16x32xf32>
    %81 = arith.mulf %79, %80 : vector<16x32xf32>
    %82 = vector.broadcast %61 : vector<1x32xf32> to vector<16x32xf32>
    %83 = arith.addf %81, %82 : vector<16x32xf32>
    %cst_48 = arith.constant 0.000000e+00 : f32
    %84 = vector.broadcast %cst_48 : f32 to vector<16x32xf32>
    %85 = arith.maximumf %83, %84 : vector<16x32xf32>
    %86 = arith.addf %15, %85 : vector<16x32xf32>
    %87 = arith.addf %43, %48 : vector<112x32xf32>
    %88 = arith.addf %87, %49 : vector<112x32xf32>
    %c0_49 = arith.constant 0 : index
    %c0_50 = arith.constant 0 : index
    %c0_51 = arith.constant 0 : index
    %89 = vector.load %arg15[%c0_49, %c0_50, %c0_51] : memref<2x1x32xf32, #tpu.memory_space<vmem>>, vector<1x1x32xf32>
    %90 = vector.shape_cast %89 : vector<1x1x32xf32> to vector<1x32xf32>
    %c0_52 = arith.constant 0 : index
    %c0_53 = arith.constant 0 : index
    %c0_54 = arith.constant 0 : index
    %91 = vector.load %arg16[%c0_52, %c0_53, %c0_54] : memref<2x1x32xf32, #tpu.memory_space<vmem>>, vector<1x1x32xf32>
    %92 = vector.shape_cast %91 : vector<1x1x32xf32> to vector<1x32xf32>
    %cst_55 = arith.constant dense<0.000000e+00> : vector<32xf32>
    %93 = vector.multi_reduction <add>, %88, %cst_55 [0] : vector<112x32xf32> to vector<32xf32>
    %94 = vector.shape_cast %93 : vector<32xf32> to vector<1x32xf32>
    %cst_56 = arith.constant 1.120000e+02 : f32
    %95 = vector.broadcast %cst_56 : f32 to vector<1x32xf32>
    %96 = arith.divf %94, %95 : vector<1x32xf32>
    %97 = vector.broadcast %96 : vector<1x32xf32> to vector<112x32xf32>
    %98 = arith.subf %88, %97 : vector<112x32xf32>
    %99 = arith.mulf %98, %98 : vector<112x32xf32>
    %cst_57 = arith.constant dense<0.000000e+00> : vector<32xf32>
    %100 = vector.multi_reduction <add>, %99, %cst_57 [0] : vector<112x32xf32> to vector<32xf32>
    %101 = vector.shape_cast %100 : vector<32xf32> to vector<1x32xf32>
    %cst_58 = arith.constant 1.120000e+02 : f32
    %102 = vector.broadcast %cst_58 : f32 to vector<1x32xf32>
    %103 = arith.divf %101, %102 : vector<1x32xf32>
    %104 = vector.broadcast %96 : vector<1x32xf32> to vector<112x32xf32>
    %105 = arith.subf %88, %104 : vector<112x32xf32>
    %cst_59 = arith.constant 9.99999974E-6 : f32
    %106 = vector.broadcast %cst_59 : f32 to vector<1x32xf32>
    %107 = arith.addf %103, %106 : vector<1x32xf32>
    %108 = math.rsqrt %107 : vector<1x32xf32>
    %109 = vector.broadcast %108 : vector<1x32xf32> to vector<112x32xf32>
    %110 = arith.mulf %105, %109 : vector<112x32xf32>
    %111 = vector.broadcast %90 : vector<1x32xf32> to vector<112x32xf32>
    %112 = arith.mulf %110, %111 : vector<112x32xf32>
    %113 = vector.broadcast %92 : vector<1x32xf32> to vector<112x32xf32>
    %114 = arith.addf %112, %113 : vector<112x32xf32>
    %cst_60 = arith.constant 0.000000e+00 : f32
    %115 = vector.broadcast %cst_60 : f32 to vector<112x32xf32>
    %116 = arith.maximumf %114, %115 : vector<112x32xf32>
    %117 = arith.addf %25, %116 : vector<112x32xf32>
    %c1_61 = arith.constant 1 : index
    %c0_62 = arith.constant 0 : index
    %c0_63 = arith.constant 0 : index
    %118 = vector.load %arg9[%c1_61, %c0_62, %c0_63] : memref<2x32x128xf32, #tpu.memory_space<vmem>>, vector<1x32x128xf32>
    %119 = vector.shape_cast %118 : vector<1x32x128xf32> to vector<32x128xf32>
    %cst_64 = arith.constant dense<0.000000e+00> : vector<16x128xf32>
    %120 = tpu.matmul %86, %119, %cst_64 {dimension_numbers = #tpu.dot_dimension_numbers<[1], [0], [0], [1], [0, 0, 1, 1], [], []>} : vector<16x32xf32>, vector<32x128xf32>, vector<16x128xf32> -> vector<16x128xf32>
    %c1_65 = arith.constant 1 : index
    %c0_66 = arith.constant 0 : index
    %c0_67 = arith.constant 0 : index
    %121 = vector.load %arg10[%c1_65, %c0_66, %c0_67] : memref<2x1x128xf32, #tpu.memory_space<vmem>>, vector<1x1x128xf32>
    %122 = vector.shape_cast %121 : vector<1x1x128xf32> to vector<1x128xf32>
    %123 = vector.broadcast %122 : vector<1x128xf32> to vector<16x128xf32>
    %124 = arith.addf %120, %123 : vector<16x128xf32>
    %c1_68 = arith.constant 1 : index
    %c0_69 = arith.constant 0 : index
    %c0_70 = arith.constant 0 : index
    %125 = vector.load %arg11[%c1_68, %c0_69, %c0_70] : memref<2x32x32xf32, #tpu.memory_space<vmem>>, vector<1x32x32xf32>
    %126 = vector.shape_cast %125 : vector<1x32x32xf32> to vector<32x32xf32>
    %cst_71 = arith.constant dense<0.000000e+00> : vector<112x32xf32>
    %127 = tpu.matmul %117, %126, %cst_71 {dimension_numbers = #tpu.dot_dimension_numbers<[1], [0], [0], [1], [0, 0, 1, 1], [], []>} : vector<112x32xf32>, vector<32x32xf32>, vector<112x32xf32> -> vector<112x32xf32>
    %c1_72 = arith.constant 1 : index
    %c0_73 = arith.constant 0 : index
    %c0_74 = arith.constant 0 : index
    %128 = vector.load %arg12[%c1_72, %c0_73, %c0_74] : memref<2x1x32xf32, #tpu.memory_space<vmem>>, vector<1x1x32xf32>
    %129 = vector.shape_cast %128 : vector<1x1x32xf32> to vector<1x32xf32>
    %130 = vector.broadcast %129 : vector<1x32xf32> to vector<112x32xf32>
    %131 = arith.addf %127, %130 : vector<112x32xf32>
    %cst_75 = arith.constant dense<0.000000e+00> : vector<112x128xf32>
    %132 = tpu.matmul %29, %124, %cst_75 {dimension_numbers = #tpu.dot_dimension_numbers<[1], [0], [0], [1], [0, 0, 1, 1], [], []>} : vector<112x16xf32>, vector<16x128xf32>, vector<112x128xf32> -> vector<112x128xf32>
    %cst_76 = arith.constant dense<0.000000e+00> : vector<112x128xf32>
    %133 = tpu.matmul %27, %124, %cst_76 {dimension_numbers = #tpu.dot_dimension_numbers<[1], [0], [0], [1], [0, 0, 1, 1], [], []>} : vector<112x16xf32>, vector<16x128xf32>, vector<112x128xf32> -> vector<112x128xf32>
    %134 = vector.extract_strided_slice %133 {offsets = [0, 64], sizes = [112, 32], strides = [1, 1]} : vector<112x128xf32> to vector<112x32xf32>
    %135 = vector.extract_strided_slice %132 {offsets = [0, 96], sizes = [112, 32], strides = [1, 1]} : vector<112x128xf32> to vector<112x32xf32>
    %136 = arith.addf %131, %134 : vector<112x32xf32>
    %137 = arith.addf %136, %135 : vector<112x32xf32>
    %c1_77 = arith.constant 1 : index
    %c0_78 = arith.constant 0 : index
    %c0_79 = arith.constant 0 : index
    %138 = vector.load %arg15[%c1_77, %c0_78, %c0_79] : memref<2x1x32xf32, #tpu.memory_space<vmem>>, vector<1x1x32xf32>
    %139 = vector.shape_cast %138 : vector<1x1x32xf32> to vector<1x32xf32>
    %c1_80 = arith.constant 1 : index
    %c0_81 = arith.constant 0 : index
    %c0_82 = arith.constant 0 : index
    %140 = vector.load %arg16[%c1_80, %c0_81, %c0_82] : memref<2x1x32xf32, #tpu.memory_space<vmem>>, vector<1x1x32xf32>
    %141 = vector.shape_cast %140 : vector<1x1x32xf32> to vector<1x32xf32>
    %cst_83 = arith.constant dense<0.000000e+00> : vector<32xf32>
    %142 = vector.multi_reduction <add>, %137, %cst_83 [0] : vector<112x32xf32> to vector<32xf32>
    %143 = vector.shape_cast %142 : vector<32xf32> to vector<1x32xf32>
    %cst_84 = arith.constant 1.120000e+02 : f32
    %144 = vector.broadcast %cst_84 : f32 to vector<1x32xf32>
    %145 = arith.divf %143, %144 : vector<1x32xf32>
    %146 = vector.broadcast %145 : vector<1x32xf32> to vector<112x32xf32>
    %147 = arith.subf %137, %146 : vector<112x32xf32>
    %148 = arith.mulf %147, %147 : vector<112x32xf32>
    %cst_85 = arith.constant dense<0.000000e+00> : vector<32xf32>
    %149 = vector.multi_reduction <add>, %148, %cst_85 [0] : vector<112x32xf32> to vector<32xf32>
    %150 = vector.shape_cast %149 : vector<32xf32> to vector<1x32xf32>
    %cst_86 = arith.constant 1.120000e+02 : f32
    %151 = vector.broadcast %cst_86 : f32 to vector<1x32xf32>
    %152 = arith.divf %150, %151 : vector<1x32xf32>
    %153 = vector.broadcast %145 : vector<1x32xf32> to vector<112x32xf32>
    %154 = arith.subf %137, %153 : vector<112x32xf32>
    %cst_87 = arith.constant 9.99999974E-6 : f32
    %155 = vector.broadcast %cst_87 : f32 to vector<1x32xf32>
    %156 = arith.addf %152, %155 : vector<1x32xf32>
    %157 = math.rsqrt %156 : vector<1x32xf32>
    %158 = vector.broadcast %157 : vector<1x32xf32> to vector<112x32xf32>
    %159 = arith.mulf %154, %158 : vector<112x32xf32>
    %160 = vector.broadcast %139 : vector<1x32xf32> to vector<112x32xf32>
    %161 = arith.mulf %159, %160 : vector<112x32xf32>
    %162 = vector.broadcast %141 : vector<1x32xf32> to vector<112x32xf32>
    %163 = arith.addf %161, %162 : vector<112x32xf32>
    %cst_88 = arith.constant 0.000000e+00 : f32
    %164 = vector.broadcast %cst_88 : f32 to vector<112x32xf32>
    %165 = arith.maximumf %163, %164 : vector<112x32xf32>
    %166 = arith.addf %117, %165 : vector<112x32xf32>
    %c0_89 = arith.constant 0 : index
    %c0_90 = arith.constant 0 : index
    %167 = vector.load %arg17[%c0_89, %c0_90] : memref<112x32xf32, #tpu.memory_space<vmem>>, vector<112x32xf32>
    tpu.vector_store %arg17[%c0_89, %c0_90], %166 {strides = array<i32>} : memref<112x32xf32, #tpu.memory_space<vmem>>, vector<112x32xf32>,
    %c0_91 = arith.constant 0 : index
    %c0_92 = arith.constant 0 : index
    %168 = vector.load %arg4[%c0_91, %c0_92] : memref<16x112xf32, #tpu.memory_space<vmem>>, vector<16x112xf32>
    %cst_93 = arith.constant dense<0.000000e+00> : vector<16x32xf32>
    %169 = tpu.matmul %168, %166, %cst_93 {dimension_numbers = #tpu.dot_dimension_numbers<[1], [0], [0], [1], [0, 0, 1, 1], [], []>} : vector<16x112xf32>, vector<112x32xf32>, vector<16x32xf32> -> vector<16x32xf32>
    %c0_94 = arith.constant 0 : index
    %c0_95 = arith.constant 0 : index
    %170 = vector.load %arg18[%c0_94, %c0_95] : memref<16x32xf32, #tpu.memory_space<vmem>>, vector<16x32xf32>
    tpu.vector_store %arg18[%c0_94, %c0_95], %169 {strides = array<i32>} : memref<16x32xf32, #tpu.memory_space<vmem>>, vector<16x32xf32>,
    return
  }
}

</mosaic_0001>

<llo_original>
// kernel: forward.1
$region0: #{forward.1}
  #allocation0 [shape = 'u32[]', space=smem, size = 0x4, offset = 0x4, fixed_abs, tag = 'smem constant byte address 0x4 - core index']
  #allocation1 [shape = 'u32[144,128]{1,0:T(1,128)}', space=vmem, size = 0x12000, scoped, tag = 'internal scratch']
  %s0 = inlined_call_operand.vmem [shape: f32[16,2], index: 0, kind: input, shape index: {}]
  %s1 = inlined_call_operand.vmem [shape: f32[112,1], index: 1, kind: input, shape index: {}]
  %s2 = inlined_call_operand.vmem [shape: bf16[112,16], index: 2, kind: input, shape index: {}]
  %s3 = inlined_call_operand.vmem [shape: bf16[112,16], index: 3, kind: input, shape index: {}]
  %s4 = inlined_call_operand.vmem [shape: f32[16,112], index: 4, kind: input, shape index: {}]
  %s5 = inlined_call_operand.vmem [shape: f32[2,32], index: 5, kind: input, shape index: {}]
  %s6 = inlined_call_operand.vmem [shape: f32[1,32], index: 6, kind: input, shape index: {}]
  %s7 = inlined_call_operand.vmem [shape: f32[1,32], index: 7, kind: input, shape index: {}]
  %s8 = inlined_call_operand.vmem [shape: f32[1,32], index: 8, kind: input, shape index: {}]
  %s9 = inlined_call_operand.vmem [shape: f32[2,32,128], index: 9, kind: input, shape index: {}]
  %s10 = inlined_call_operand.vmem [shape: f32[2,1,128], index: 10, kind: input, shape index: {}]
  %s11 = inlined_call_operand.vmem [shape: f32[2,32,32], index: 11, kind: input, shape index: {}]
  %s12 = inlined_call_operand.vmem [shape: f32[2,1,32], index: 12, kind: input, shape index: {}]
  %s13 = inlined_call_operand.vmem [shape: f32[2,1,32], index: 13, kind: input, shape index: {}]
  %s14 = inlined_call_operand.vmem [shape: f32[2,1,32], index: 14, kind: input, shape index: {}]
  %s15 = inlined_call_operand.vmem [shape: f32[2,1,32], index: 15, kind: input, shape index: {}]
  %s16 = inlined_call_operand.vmem [shape: f32[2,1,32], index: 16, kind: input, shape index: {}]
  %s17 = inlined_call_operand.vmem [shape: f32[112,32], index: 17, kind: output, shape index: {0}]
  %s18 = inlined_call_operand.hbm [shape: f32[16,32], index: 18, kind: output, shape index: {1}]
  %19 = xla_tuple %s17, %s18
  %s20 = sld [smem:[#allocation0]]
  $region86: #{forward.1} parent=0
    _
  %s22 = ssub.s32 1, %s20
  %s23 = scalar_select 0, %s22, %s20
  $region1: #{forward.1} parent=0
    #allocation2 [shape = 'u8[8192]{0}', space=vmem, size = 0x2000, scoped, tag = 'output window, operand 1, single buffered']
    #allocation3 [shape = 's32[1]{0}', space=sflag, size = 0x4, scoped, tag = 'scoped memory for forward.1']
    %24 = vsyncpa [#allocation3], 0
    // Predicated region
    $region2: #{forward.1} parent=1 // pred_check
      _
    $region3: #{forward.1} parent=1 // pred_check_branch
      %26 = sbr.rel (0) target = $region5
    $region4: #{forward.1} parent=1 // pred_region
      _
    $region5: #{forward.1} parent=1 // pred_fallthru
      _
    // Predicated region
    $region6: #{forward.1} parent=1 // pred_check
      _
    $region7: #{forward.1} parent=1 // pred_check_branch
      %28 = sbr.rel (0) target = $region9
    $region8: #{forward.1} parent=1 // pred_region
      _
    $region9: #{forward.1} parent=1 // pred_fallthru
      _
    // Predicated region
    $region10: #{forward.1} parent=1 // pred_check
      _
    $region11: #{forward.1} parent=1 // pred_check_branch
      %30 = sbr.rel (0) target = $region13
    $region12: #{forward.1} parent=1 // pred_region
      _
    $region13: #{forward.1} parent=1 // pred_fallthru
      _
    // Predicated region
    $region14: #{forward.1} parent=1 // pred_check
      _
    $region15: #{forward.1} parent=1 // pred_check_branch
      %32 = sbr.rel (0) target = $region17
    $region16: #{forward.1} parent=1 // pred_region
      _
    $region17: #{forward.1} parent=1 // pred_fallthru
      _
    // Predicated region
    $region18: #{forward.1} parent=1 // pred_check
      _
    $region19: #{forward.1} parent=1 // pred_check_branch
      %34 = sbr.rel (0) target = $region21
    $region20: #{forward.1} parent=1 // pred_region
      _
    $region21: #{forward.1} parent=1 // pred_fallthru
      _
    // Predicated region
    $region22: #{forward.1} parent=1 // pred_check
      _
    $region23: #{forward.1} parent=1 // pred_check_branch
      %36 = sbr.rel (0) target = $region25
    $region24: #{forward.1} parent=1 // pred_region
      _
    $region25: #{forward.1} parent=1 // pred_fallthru
      _
    // Predicated region
    $region26: #{forward.1} parent=1 // pred_check
      _
    $region27: #{forward.1} parent=1 // pred_check_branch
      %38 = sbr.rel (0) target = $region29
    $region28: #{forward.1} parent=1 // pred_region
      _
    $region29: #{forward.1} parent=1 // pred_fallthru
      _
    // Predicated region
    $region30: #{forward.1} parent=1 // pred_check
      _
    $region31: #{forward.1} parent=1 // pred_check_branch
      %40 = sbr.rel (0) target = $region33
    $region32: #{forward.1} parent=1 // pred_region
      _
    $region33: #{forward.1} parent=1 // pred_fallthru
      _
    // Predicated region
    $region34: #{forward.1} parent=1 // pred_check
      _
    $region35: #{forward.1} parent=1 // pred_check_branch
      %42 = sbr.rel (0) target = $region37
    $region36: #{forward.1} parent=1 // pred_region
      _
    $region37: #{forward.1} parent=1 // pred_fallthru
      _
    // Predicated region
    $region38: #{forward.1} parent=1 // pred_check
      _
    $region39: #{forward.1} parent=1 // pred_check_branch
      %44 = sbr.rel (0) target = $region41
    $region40: #{forward.1} parent=1 // pred_region
      _
    $region41: #{forward.1} parent=1 // pred_fallthru
      _
    // Predicated region
    $region42: #{forward.1} parent=1 // pred_check
      _
    $region43: #{forward.1} parent=1 // pred_check_branch
      %46 = sbr.rel (0) target = $region45
    $region44: #{forward.1} parent=1 // pred_region
      _
    $region45: #{forward.1} parent=1 // pred_fallthru
      _
    // Predicated region
    $region46: #{forward.1} parent=1 // pred_check
      _
    $region47: #{forward.1} parent=1 // pred_check_branch
      %48 = sbr.rel (0) target = $region49
    $region48: #{forward.1} parent=1 // pred_region
      _
    $region49: #{forward.1} parent=1 // pred_fallthru
      _
    // Predicated region
    $region50: #{forward.1} parent=1 // pred_check
      _
    $region51: #{forward.1} parent=1 // pred_check_branch
      %50 = sbr.rel (0) target = $region53
    $region52: #{forward.1} parent=1 // pred_region
      _
    $region53: #{forward.1} parent=1 // pred_fallthru
      _
    // Predicated region
    $region54: #{forward.1} parent=1 // pred_check
      _
    $region55: #{forward.1} parent=1 // pred_check_branch
      %52 = sbr.rel (0) target = $region57
    $region56: #{forward.1} parent=1 // pred_region
      _
    $region57: #{forward.1} parent=1 // pred_fallthru
      _
    // Predicated region
    $region58: #{forward.1} parent=1 // pred_check
      _
    $region59: #{forward.1} parent=1 // pred_check_branch
      %54 = sbr.rel (0) target = $region61
    $region60: #{forward.1} parent=1 // pred_region
      _
    $region61: #{forward.1} parent=1 // pred_fallthru
      _
    // Predicated region
    $region62: #{forward.1} parent=1 // pred_check
      _
    $region63: #{forward.1} parent=1 // pred_check_branch
      %56 = sbr.rel (0) target = $region65
    $region64: #{forward.1} parent=1 // pred_region
      _
    $region65: #{forward.1} parent=1 // pred_fallthru
      _
    // Predicated region
    $region66: #{forward.1} parent=1 // pred_check
      _
    $region67: #{forward.1} parent=1 // pred_check_branch
      %58 = sbr.rel (0) target = $region69
    $region68: #{forward.1} parent=1 // pred_region
      _
    $region69: #{forward.1} parent=1 // pred_fallthru
      _
    %v59 = vld [vmem:[%s6] sm:$0x1]
    %v60 = vld [vmem:[%s0] sm:$0xff]
    %v61 = vld [vmem:[%s0 + $0x8] sm:$0xff]
    %v62 = vld [vmem:[%s5] sm:$0x1]
    %64 = vset.pattern.permute.xlu0 0
    %65 = vperm.xlu0 %64, %v60
    %v66 = vpop.permute.xlu0 %65
    %69 = vset.pattern.permute.xlu0 0
    %70 = vperm.xlu0 %69, %v61
    %v71 = vpop.permute.xlu0 %70
    %v73 = vlaneseq
    %v74 = vshrl.u32 %v73, 7
    %v75 = vsub.s32 0, %v74
    %v76 = vrot.slane %v62, %v75
    %v77 = vmul.f32 %v66, %v76
    %v78 = vmul.f32 %v71, %v76
    %v80 = vlaneseq
    %v81 = vshrl.u32 %v80, 7
    %v82 = vsub.s32 0, %v81
    %v83 = vrot.slane %v59, %v82
    %v85 = vadd.f32 %v83, %v77
    %v86 = vadd.f32 %v83, %v78
    %v87 = vld [vmem:[%s5 + $0x1] sm:$0x1]
    %88 = vset.pattern.permute.xlu0 1
    %89 = vperm.xlu0 %88, %v60
    %v90 = vpop.permute.xlu0 %89
    %92 = vset.pattern.permute.xlu0 1
    %93 = vperm.xlu0 %92, %v61
    %v94 = vpop.permute.xlu0 %93
    %v96 = vlaneseq
    %v97 = vshrl.u32 %v96, 7
    %v98 = vsub.s32 0, %v97
    %v99 = vrot.slane %v87, %v98
    %v100 = vmul.f32 %v90, %v99
    %v101 = vmul.f32 %v94, %v99
    %v102 = vadd.f32 %v85, %v100
    %v103 = vadd.f32 %v86, %v101
    %v104 = vmax.f32 %v102, 0.0
    %v105 = vmax.f32 %v103, 0.0
    %v106 = vld [vmem:[%s1] sm:$0xff]
    %v107 = vld [vmem:[%s1 + $0x8] sm:$0xff]
    %v108 = vld [vmem:[%s1 + $0x10] sm:$0xff]
    %v109 = vld [vmem:[%s1 + $0x18] sm:$0xff]
    %v110 = vld [vmem:[%s1 + $0x20] sm:$0xff]
    %v111 = vld [vmem:[%s1 + $0x28] sm:$0xff]
    %v112 = vld [vmem:[%s1 + $0x30] sm:$0xff]
    %v113 = vld [vmem:[%s1 + $0x38] sm:$0xff]
    %v114 = vld [vmem:[%s1 + $0x40] sm:$0xff]
    %v115 = vld [vmem:[%s1 + $0x48] sm:$0xff]
    %v116 = vld [vmem:[%s1 + $0x50] sm:$0xff]
    %v117 = vld [vmem:[%s1 + $0x58] sm:$0xff]
    %v118 = vld [vmem:[%s1 + $0x60] sm:$0xff]
    %v119 = vld [vmem:[%s1 + $0x68] sm:$0xff]
    %v120 = vld [vmem:[%s7] sm:$0x1]
    %122 = vset.pattern.permute.xlu0 0
    %123 = vperm.xlu0 %122, %v106
    %v124 = vpop.permute.xlu0 %123
    %127 = vset.pattern.permute.xlu0 0
    %128 = vperm.xlu0 %127, %v107
    %v129 = vpop.permute.xlu0 %128
    %132 = vset.pattern.permute.xlu0 0
    %133 = vperm.xlu0 %132, %v108
    %v134 = vpop.permute.xlu0 %133
    %137 = vset.pattern.permute.xlu0 0
    %138 = vperm.xlu0 %137, %v109
    %v139 = vpop.permute.xlu0 %138
    %142 = vset.pattern.permute.xlu0 0
    %143 = vperm.xlu0 %142, %v110
    %v144 = vpop.permute.xlu0 %143
    %147 = vset.pattern.permute.xlu0 0
    %148 = vperm.xlu0 %147, %v111
    %v149 = vpop.permute.xlu0 %148
    %152 = vset.pattern.permute.xlu0 0
    %153 = vperm.xlu0 %152, %v112
    %v154 = vpop.permute.xlu0 %153
    %157 = vset.pattern.permute.xlu0 0
    %158 = vperm.xlu0 %157, %v113
    %v159 = vpop.permute.xlu0 %158
    %162 = vset.pattern.permute.xlu0 0
    %163 = vperm.xlu0 %162, %v114
    %v164 = vpop.permute.xlu0 %163
    %167 = vset.pattern.permute.xlu0 0
    %168 = vperm.xlu0 %167, %v115
    %v169 = vpop.permute.xlu0 %168
    %172 = vset.pattern.permute.xlu0 0
    %173 = vperm.xlu0 %172, %v116
    %v174 = vpop.permute.xlu0 %173
    %177 = vset.pattern.permute.xlu0 0
    %178 = vperm.xlu0 %177, %v117
    %v179 = vpop.permute.xlu0 %178
    %182 = vset.pattern.permute.xlu0 0
    %183 = vperm.xlu0 %182, %v118
    %v184 = vpop.permute.xlu0 %183
    %187 = vset.pattern.permute.xlu0 0
    %188 = vperm.xlu0 %187, %v119
    %v189 = vpop.permute.xlu0 %188
    %v192 = vlaneseq
    %v193 = vshrl.u32 %v192, 7
    %v194 = vsub.s32 0, %v193
    %v195 = vrot.slane %v120, %v194
    %v197 = vmul.f32 %v124, %v195
    %v198 = vmul.f32 %v129, %v195
    %v199 = vmul.f32 %v134, %v195
    %v200 = vmul.f32 %v139, %v195
    %v201 = vmul.f32 %v144, %v195
    %v202 = vmul.f32 %v149, %v195
    %v203 = vmul.f32 %v154, %v195
    %v204 = vmul.f32 %v159, %v195
    %v205 = vmul.f32 %v164, %v195
    %v206 = vmul.f32 %v169, %v195
    %v207 = vmul.f32 %v174, %v195
    %v208 = vmul.f32 %v179, %v195
    %v209 = vmul.f32 %v184, %v195
    %v210 = vmul.f32 %v189, %v195
    %v211 = vld [vmem:[%s8] sm:$0x1]
    %v213 = vlaneseq
    %v214 = vshrl.u32 %v213, 7
    %v215 = vsub.s32 0, %v214
    %v216 = vrot.slane %v211, %v215
    %v218 = vadd.f32 %v197, %v216
    %v219 = vadd.f32 %v198, %v216
    %v220 = vadd.f32 %v199, %v216
    %v221 = vadd.f32 %v200, %v216
    %v222 = vadd.f32 %v201, %v216
    %v223 = vadd.f32 %v202, %v216
    %v224 = vadd.f32 %v203, %v216
    %v225 = vadd.f32 %v204, %v216
    %v226 = vadd.f32 %v205, %v216
    %v227 = vadd.f32 %v206, %v216
    %v228 = vadd.f32 %v207, %v216
    %v229 = vadd.f32 %v208, %v216
    %v230 = vadd.f32 %v209, %v216
    %v231 = vadd.f32 %v210, %v216
    %v232 = vmax.f32 %v218, 0.0
    %v233 = vmax.f32 %v219, 0.0
    %v234 = vmax.f32 %v220, 0.0
    %v235 = vmax.f32 %v221, 0.0
    %v236 = vmax.f32 %v222, 0.0
    %v237 = vmax.f32 %v223, 0.0
    %v238 = vmax.f32 %v224, 0.0
    %v239 = vmax.f32 %v225, 0.0
    %v240 = vmax.f32 %v226, 0.0
    %v241 = vmax.f32 %v227, 0.0
    %v242 = vmax.f32 %v228, 0.0
    %v243 = vmax.f32 %v229, 0.0
    %v244 = vmax.f32 %v230, 0.0
    %v245 = vmax.f32 %v231, 0.0
    %v246 = vld [vmem:[%s2] sm:$0xf]
    %v247 = vld [vmem:[%s2 + $0x4] sm:$0xf]
    %v248 = vld [vmem:[%s2 + $0x8] sm:$0xf]
    %v249 = vld [vmem:[%s2 + $0xc] sm:$0xf]
    %v250 = vld [vmem:[%s2 + $0x10] sm:$0xf]
    %v251 = vld [vmem:[%s2 + $0x14] sm:$0xf]
    %v252 = vld [vmem:[%s2 + $0x18] sm:$0xf]
    %v253 = vld [vmem:[%s2 + $0x1c] sm:$0xf]
    %v254 = vld [vmem:[%s2 + $0x20] sm:$0xf]
    %v255 = vld [vmem:[%s2 + $0x24] sm:$0xf]
    %v256 = vld [vmem:[%s2 + $0x28] sm:$0xf]
    %v257 = vld [vmem:[%s2 + $0x2c] sm:$0xf]
    %v258 = vld [vmem:[%s2 + $0x30] sm:$0xf]
    %v259 = vld [vmem:[%s2 + $0x34] sm:$0xf]
    %v260 = vunpack.c.l.bf16 %v246
    %v261 = vunpack.c.l.bf16 %v247
    %v262 = vunpack.c.l.bf16 %v248
    %v263 = vunpack.c.l.bf16 %v249
    %v264 = vunpack.c.l.bf16 %v250
    %v265 = vunpack.c.l.bf16 %v251
    %v266 = vunpack.c.l.bf16 %v252
    %v267 = vunpack.c.l.bf16 %v253
    %v268 = vunpack.c.l.bf16 %v254
    %v269 = vunpack.c.l.bf16 %v255
    %v270 = vunpack.c.l.bf16 %v256
    %v271 = vunpack.c.l.bf16 %v257
    %v272 = vunpack.c.l.bf16 %v258
    %v273 = vunpack.c.l.bf16 %v259
    %v274 = vld [vmem:[%s3] sm:$0xf]
    %v275 = vld [vmem:[%s3 + $0x4] sm:$0xf]
    %v276 = vld [vmem:[%s3 + $0x8] sm:$0xf]
    %v277 = vld [vmem:[%s3 + $0xc] sm:$0xf]
    %v278 = vld [vmem:[%s3 + $0x10] sm:$0xf]
    %v279 = vld [vmem:[%s3 + $0x14] sm:$0xf]
    %v280 = vld [vmem:[%s3 + $0x18] sm:$0xf]
    %v281 = vld [vmem:[%s3 + $0x1c] sm:$0xf]
    %v282 = vld [vmem:[%s3 + $0x20] sm:$0xf]
    %v283 = vld [vmem:[%s3 + $0x24] sm:$0xf]
    %v284 = vld [vmem:[%s3 + $0x28] sm:$0xf]
    %v285 = vld [vmem:[%s3 + $0x2c] sm:$0xf]
    %v286 = vld [vmem:[%s3 + $0x30] sm:$0xf]
    %v287 = vld [vmem:[%s3 + $0x34] sm:$0xf]
    %v288 = vunpack.c.l.bf16 %v274
    %v289 = vunpack.c.l.bf16 %v275
    %v290 = vunpack.c.l.bf16 %v276
    %v291 = vunpack.c.l.bf16 %v277
    %v292 = vunpack.c.l.bf16 %v278
    %v293 = vunpack.c.l.bf16 %v279
    %v294 = vunpack.c.l.bf16 %v280
    %v295 = vunpack.c.l.bf16 %v281
    %v296 = vunpack.c.l.bf16 %v282
    %v297 = vunpack.c.l.bf16 %v283
    %v298 = vunpack.c.l.bf16 %v284
    %v299 = vunpack.c.l.bf16 %v285
    %v300 = vunpack.c.l.bf16 %v286
    %v301 = vunpack.c.l.bf16 %v287
    %v302 = vld [vmem:[%s9] sm:$0xff]
    %v303 = vld [vmem:[%s9 + $0x8] sm:$0xff]
    %v304 = vld [vmem:[%s9 + $0x10] sm:$0xff]
    %v305 = vld [vmem:[%s9 + $0x18] sm:$0xff]
    %v306 = vld [vmem:[%s10] sm:$0x1]
    %v308 = vlaneseq
    %v309 = vshrl.u32 %v308, 7
    %v310 = vsub.s32 0, %v309
    %v311 = vrot.slane %v306, %v310
    %vm313 = vcmask 261120
    %v315 = vsel %vm313, %v104, 0
    %v318 = vsel %vm313, %v105, 0
    %320 = vmatprep.subr.mxu0 0.0
    %321 = vmatpush1.msra.mxu0 %v302
    %322 = vmatprep.subr.mxu0 0.0
    %323 = vmatpush1.msra.mxu0 %v303
    %324 = vmatprep.subr.mxu0 0.0
    %325 = vmatpush1.msra.mxu0 %v304
    %326 = vmatprep.subr.mxu0 0.0
    %327 = vmatpush1.msra.mxu0 %v305
    %328 = vmatprep.subr.mxu0 0.0
    %329 = vmatpush1.msra.mxu0 0.0
    %330 = vmatprep.subr.mxu0 0.0
    %331 = vmatpush1.msra.mxu0 0.0
    %332 = vmatprep.subr.mxu0 0.0
    %333 = vmatpush1.msra.mxu0 0.0
    %334 = vmatprep.subr.mxu0 0.0
    %335 = vmatpush1.msra.mxu0 0.0
    %336 = vmatprep.subr.mxu0 0.0
    %337 = vmatpush1.msra.mxu0 0.0
    %338 = vmatprep.subr.mxu0 0.0
    %339 = vmatpush1.msra.mxu0 0.0
    %340 = vmatprep.subr.mxu0 0.0
    %341 = vmatpush1.msra.mxu0 0.0
    %342 = vmatprep.subr.mxu0 0.0
    %343 = vmatpush1.msra.mxu0 0.0
    %344 = vmatprep.subr.mxu0 0.0
    %345 = vmatpush1.msra.mxu0 0.0
    %346 = vmatprep.subr.mxu0 0.0
    %347 = vmatpush1.msra.mxu0 0.0
    %348 = vmatprep.subr.mxu0 0.0
    %349 = vmatpush1.msra.mxu0 0.0
    %350 = vmatprep.subr.mxu0 0.0
    %351 = vmatpush1.msra.mxu0 0.0
    %352 = vmatprep.subr.mxu0 0.0
    %353 = vmatpush1.msra.mxu0 0.0
    %354 = vmatprep.subr.mxu0 0.0
    %355 = vmatpush1.msra.mxu0 0.0
    %356 = vmatprep.subr.mxu0 0.0
    %357 = vmatpush1.msra.mxu0 0.0
    %358 = vmatprep.subr.mxu0 0.0
    %359 = vmatpush1.msra.mxu0 0.0
    %360 = vmatprep.subr.mxu0 0.0
    %361 = vmatpush1.msra.mxu0 0.0
    %362 = vmatprep.subr.mxu0 0.0
    %363 = vmatpush1.msra.mxu0 0.0
    %364 = vmatprep.subr.mxu0 0.0
    %365 = vmatpush1.msra.mxu0 0.0
    %366 = vmatprep.subr.mxu0 0.0
    %367 = vmatpush1.msra.mxu0 0.0
    %368 = vmatprep.subr.mxu0 0.0
    %369 = vmatpush1.msra.mxu0 0.0
    %370 = vmatprep.subr.mxu0 0.0
    %371 = vmatpush1.msra.mxu0 0.0
    %372 = vmatprep.subr.mxu0 0.0
    %373 = vmatpush1.msra.mxu0 0.0
    %374 = vmatprep.subr.mxu0 0.0
    %375 = vmatpush1.msra.mxu0 0.0
    %376 = vmatprep.subr.mxu0 0.0
    %377 = vmatpush1.msra.mxu0 0.0
    %378 = vmatprep.subr.mxu0 0.0
    %379 = vmatpush1.msra.mxu0 0.0
    %380 = vmatprep.subr.mxu0 0.0
    %381 = vmatpush1.msra.mxu0 0.0
    %382 = vmatprep.subr.mxu0 0.0
    %383 = vmatpush1.msra.mxu0 0.0
    %384 = vmatprep.mubr.f32.mxu0 0.0
    %385 = vmatmul.mubr.f32.gmra.mrb[0].mxu0 %v315
    %v386 = vpop.f32.mrb[0].mxu0
    %v387 = vadd.f32 %v311, %v386
    %v388 = vpop.f32.mrb[0].mxu0
    %389 = vmatprep.mubr.f32.mxu0 0.0
    %390 = vmatmul.mubr.f32.gmra.mrb[0].mxu0 %v318
    %v391 = vpop.f32.mrb[0].mxu0
    %v392 = vadd.f32 %v311, %v391
    %v393 = vpop.f32.mrb[0].mxu0
    %394 = vdwg.mxu0
    %v395 = vld [vmem:[%s11] sm:$0xff]
    %v396 = vld [vmem:[%s11 + $0x8] sm:$0xff]
    %v397 = vld [vmem:[%s11 + $0x10] sm:$0xff]
    %v398 = vld [vmem:[%s11 + $0x18] sm:$0xff]
    %v399 = vld [vmem:[%s12] sm:$0x1]
    %v401 = vlaneseq
    %v402 = vshrl.u32 %v401, 7
    %v403 = vsub.s32 0, %v402
    %v404 = vrot.slane %v399, %v403
    %v407 = vsel %vm313, %v232, 0
    %v410 = vsel %vm313, %v233, 0
    %v413 = vsel %vm313, %v234, 0
    %v416 = vsel %vm313, %v235, 0
    %v419 = vsel %vm313, %v236, 0
    %v422 = vsel %vm313, %v237, 0
    %v425 = vsel %vm313, %v238, 0
    %v428 = vsel %vm313, %v239, 0
    %v431 = vsel %vm313, %v240, 0
    %v434 = vsel %vm313, %v241, 0
    %v437 = vsel %vm313, %v242, 0
    %v440 = vsel %vm313, %v243, 0
    %v443 = vsel %vm313, %v244, 0
    %v446 = vsel %vm313, %v245, 0
    %448 = vmatprep.subr.mxu0 0.0
    %449 = vmatpush1.msra.mxu0 %v395
    %450 = vmatprep.subr.mxu0 0.0
    %451 = vmatpush1.msra.mxu0 %v396
    %452 = vmatprep.subr.mxu0 0.0
    %453 = vmatpush1.msra.mxu0 %v397
    %454 = vmatprep.subr.mxu0 0.0
    %455 = vmatpush1.msra.mxu0 %v398
    %456 = vmatprep.subr.mxu0 0.0
    %457 = vmatpush1.msra.mxu0 0.0
    %458 = vmatprep.subr.mxu0 0.0
    %459 = vmatpush1.msra.mxu0 0.0
    %460 = vmatprep.subr.mxu0 0.0
    %461 = vmatpush1.msra.mxu0 0.0
    %462 = vmatprep.subr.mxu0 0.0
    %463 = vmatpush1.msra.mxu0 0.0
    %464 = vmatprep.subr.mxu0 0.0
    %465 = vmatpush1.msra.mxu0 0.0
    %466 = vmatprep.subr.mxu0 0.0
    %467 = vmatpush1.msra.mxu0 0.0
    %468 = vmatprep.subr.mxu0 0.0
    %469 = vmatpush1.msra.mxu0 0.0
    %470 = vmatprep.subr.mxu0 0.0
    %471 = vmatpush1.msra.mxu0 0.0
    %472 = vmatprep.subr.mxu0 0.0
    %473 = vmatpush1.msra.mxu0 0.0
    %474 = vmatprep.subr.mxu0 0.0
    %475 = vmatpush1.msra.mxu0 0.0
    %476 = vmatprep.subr.mxu0 0.0
    %477 = vmatpush1.msra.mxu0 0.0
    %478 = vmatprep.subr.mxu0 0.0
    %479 = vmatpush1.msra.mxu0 0.0
    %480 = vmatprep.subr.mxu0 0.0
    %481 = vmatpush1.msra.mxu0 0.0
    %482 = vmatprep.subr.mxu0 0.0
    %483 = vmatpush1.msra.mxu0 0.0
    %484 = vmatprep.subr.mxu0 0.0
    %485 = vmatpush1.msra.mxu0 0.0
    %486 = vmatprep.subr.mxu0 0.0
    %487 = vmatpush1.msra.mxu0 0.0
    %488 = vmatprep.subr.mxu0 0.0
    %489 = vmatpush1.msra.mxu0 0.0
    %490 = vmatprep.subr.mxu0 0.0
    %491 = vmatpush1.msra.mxu0 0.0
    %492 = vmatprep.subr.mxu0 0.0
    %493 = vmatpush1.msra.mxu0 0.0
    %494 = vmatprep.subr.mxu0 0.0
    %495 = vmatpush1.msra.mxu0 0.0
    %496 = vmatprep.subr.mxu0 0.0
    %497 = vmatpush1.msra.mxu0 0.0
    %498 = vmatprep.subr.mxu0 0.0
    %499 = vmatpush1.msra.mxu0 0.0
    %500 = vmatprep.subr.mxu0 0.0
    %501 = vmatpush1.msra.mxu0 0.0
    %502 = vmatprep.subr.mxu0 0.0
    %503 = vmatpush1.msra.mxu0 0.0
    %504 = vmatprep.subr.mxu0 0.0
    %505 = vmatpush1.msra.mxu0 0.0
    %506 = vmatprep.subr.mxu0 0.0
    %507 = vmatpush1.msra.mxu0 0.0
    %508 = vmatprep.subr.mxu0 0.0
    %509 = vmatpush1.msra.mxu0 0.0
    %510 = vmatprep.subr.mxu0 0.0
    %511 = vmatpush1.msra.mxu0 0.0
    %512 = vmatprep.mubr.f32.mxu0 0.0
    %513 = vmatmul.mubr.f32.gmra.mrb[0].mxu0 %v407
    %v514 = vpop.f32.mrb[0].mxu0
    %v515 = vadd.f32 %v404, %v514
    %v516 = vpop.f32.mrb[0].mxu0
    %517 = vmatprep.mubr.f32.mxu0 0.0
    %518 = vmatmul.mubr.f32.gmra.mrb[0].mxu0 %v410
    %v519 = vpop.f32.mrb[0].mxu0
    %v520 = vadd.f32 %v404, %v519
    %v521 = vpop.f32.mrb[0].mxu0
    %522 = vmatprep.mubr.f32.mxu0 0.0
    %523 = vmatmul.mubr.f32.gmra.mrb[0].mxu0 %v413
    %v524 = vpop.f32.mrb[0].mxu0
    %v525 = vadd.f32 %v404, %v524
    %v526 = vpop.f32.mrb[0].mxu0
    %527 = vmatprep.mubr.f32.mxu0 0.0
    %528 = vmatmul.mubr.f32.gmra.mrb[0].mxu0 %v416
    %v529 = vpop.f32.mrb[0].mxu0
    %v530 = vadd.f32 %v404, %v529
    %v531 = vpop.f32.mrb[0].mxu0
    %532 = vmatprep.mubr.f32.mxu0 0.0
    %533 = vmatmul.mubr.f32.gmra.mrb[0].mxu0 %v419
    %v534 = vpop.f32.mrb[0].mxu0
    %v535 = vadd.f32 %v404, %v534
    %v536 = vpop.f32.mrb[0].mxu0
    %537 = vmatprep.mubr.f32.mxu0 0.0
    %538 = vmatmul.mubr.f32.gmra.mrb[0].mxu0 %v422
    %v539 = vpop.f32.mrb[0].mxu0
    %v540 = vadd.f32 %v404, %v539
    %v541 = vpop.f32.mrb[0].mxu0
    %542 = vmatprep.mubr.f32.mxu0 0.0
    %543 = vmatmul.mubr.f32.gmra.mrb[0].mxu0 %v425
    %v544 = vpop.f32.mrb[0].mxu0
    %v545 = vadd.f32 %v404, %v544
    %v546 = vpop.f32.mrb[0].mxu0
    %547 = vmatprep.mubr.f32.mxu0 0.0
    %548 = vmatmul.mubr.f32.gmra.mrb[0].mxu0 %v428
    %v549 = vpop.f32.mrb[0].mxu0
    %v550 = vadd.f32 %v404, %v549
    %v551 = vpop.f32.mrb[0].mxu0
    %552 = vmatprep.mubr.f32.mxu0 0.0
    %553 = vmatmul.mubr.f32.gmra.mrb[0].mxu0 %v431
    %v554 = vpop.f32.mrb[0].mxu0
    %v555 = vadd.f32 %v404, %v554
    %v556 = vpop.f32.mrb[0].mxu0
    %557 = vmatprep.mubr.f32.mxu0 0.0
    %558 = vmatmul.mubr.f32.gmra.mrb[0].mxu0 %v434
    %v559 = vpop.f32.mrb[0].mxu0
    %v560 = vadd.f32 %v404, %v559
    %v561 = vpop.f32.mrb[0].mxu0
    %562 = vmatprep.mubr.f32.mxu0 0.0
    %563 = vmatmul.mubr.f32.gmra.mrb[0].mxu0 %v437
    %v564 = vpop.f32.mrb[0].mxu0
    %v565 = vadd.f32 %v404, %v564
    %v566 = vpop.f32.mrb[0].mxu0
    %567 = vmatprep.mubr.f32.mxu0 0.0
    %568 = vmatmul.mubr.f32.gmra.mrb[0].mxu0 %v440
    %v569 = vpop.f32.mrb[0].mxu0
    %v570 = vadd.f32 %v404, %v569
    %v571 = vpop.f32.mrb[0].mxu0
    %572 = vmatprep.mubr.f32.mxu0 0.0
    %573 = vmatmul.mubr.f32.gmra.mrb[0].mxu0 %v443
    %v574 = vpop.f32.mrb[0].mxu0
    %v575 = vadd.f32 %v404, %v574
    %v576 = vpop.f32.mrb[0].mxu0
    %577 = vmatprep.mubr.f32.mxu0 0.0
    %578 = vmatmul.mubr.f32.gmra.mrb[0].mxu0 %v446
    %v579 = vpop.f32.mrb[0].mxu0
    %v580 = vadd.f32 %v404, %v579
    %v581 = vpop.f32.mrb[0].mxu0
    %582 = vdwg.mxu0
    %vm583 = vcmask 130048
    %v585 = vsel %vm583, %v288, 0
    %v588 = vsel %vm583, %v289, 0
    %v591 = vsel %vm583, %v290, 0
    %v594 = vsel %vm583, %v291, 0
    %v597 = vsel %vm583, %v292, 0
    %v600 = vsel %vm583, %v293, 0
    %v603 = vsel %vm583, %v294, 0
    %v606 = vsel %vm583, %v295, 0
    %v609 = vsel %vm583, %v296, 0
    %v612 = vsel %vm583, %v297, 0
    %v615 = vsel %vm583, %v298, 0
    %v618 = vsel %vm583, %v299, 0
    %v621 = vsel %vm583, %v300, 0
    %v624 = vsel %vm583, %v301, 0
    %626 = vmatprep.subr.mxu0 0.0
    %627 = vmatpush1.msra.mxu0 %v387
    %628 = vmatprep.subr.mxu0 0.0
    %629 = vmatpush1.msra.mxu0 %v392
    %630 = vmatprep.subr.mxu0 0.0
    %631 = vmatpush1.msra.mxu0 0.0
    %632 = vmatprep.subr.mxu0 0.0
    %633 = vmatpush1.msra.mxu0 0.0
    %634 = vmatprep.subr.mxu0 0.0
    %635 = vmatpush1.msra.mxu0 0.0
    %636 = vmatprep.subr.mxu0 0.0
    %637 = vmatpush1.msra.mxu0 0.0
    %638 = vmatprep.subr.mxu0 0.0
    %639 = vmatpush1.msra.mxu0 0.0
    %640 = vmatprep.subr.mxu0 0.0
    %641 = vmatpush1.msra.mxu0 0.0
    %642 = vmatprep.subr.mxu0 0.0
    %643 = vmatpush1.msra.mxu0 0.0
    %644 = vmatprep.subr.mxu0 0.0
    %645 = vmatpush1.msra.mxu0 0.0
    %646 = vmatprep.subr.mxu0 0.0
    %647 = vmatpush1.msra.mxu0 0.0
    %648 = vmatprep.subr.mxu0 0.0
    %649 = vmatpush1.msra.mxu0 0.0
    %650 = vmatprep.subr.mxu0 0.0
    %651 = vmatpush1.msra.mxu0 0.0
    %652 = vmatprep.subr.mxu0 0.0
    %653 = vmatpush1.msra.mxu0 0.0
    %654 = vmatprep.subr.mxu0 0.0
    %655 = vmatpush1.msra.mxu0 0.0
    %656 = vmatprep.subr.mxu0 0.0
    %657 = vmatpush1.msra.mxu0 0.0
    %658 = vmatprep.subr.mxu0 0.0
    %659 = vmatpush1.msra.mxu0 0.0
    %660 = vmatprep.subr.mxu0 0.0
    %661 = vmatpush1.msra.mxu0 0.0
    %662 = vmatprep.subr.mxu0 0.0
    %663 = vmatpush1.msra.mxu0 0.0
    %664 = vmatprep.subr.mxu0 0.0
    %665 = vmatpush1.msra.mxu0 0.0
    %666 = vmatprep.subr.mxu0 0.0
    %667 = vmatpush1.msra.mxu0 0.0
    %668 = vmatprep.subr.mxu0 0.0
    %669 = vmatpush1.msra.mxu0 0.0
    %670 = vmatprep.subr.mxu0 0.0
    %671 = vmatpush1.msra.mxu0 0.0
    %672 = vmatprep.subr.mxu0 0.0
    %673 = vmatpush1.msra.mxu0 0.0
    %674 = vmatprep.subr.mxu0 0.0
    %675 = vmatpush1.msra.mxu0 0.0
    %676 = vmatprep.subr.mxu0 0.0
    %677 = vmatpush1.msra.mxu0 0.0
    %678 = vmatprep.subr.mxu0 0.0
    %679 = vmatpush1.msra.mxu0 0.0
    %680 = vmatprep.subr.mxu0 0.0
    %681 = vmatpush1.msra.mxu0 0.0
    %682 = vmatprep.subr.mxu0 0.0
    %683 = vmatpush1.msra.mxu0 0.0
    %684 = vmatprep.subr.mxu0 0.0
    %685 = vmatpush1.msra.mxu0 0.0
    %686 = vmatprep.subr.mxu0 0.0
    %687 = vmatpush1.msra.mxu0 0.0
    %688 = vmatprep.subr.mxu0 0.0
    %689 = vmatpush1.msra.mxu0 0.0
    %690 = vmatprep.mubr.f32.mxu0 0.0
    %691 = vmatmul.mubr.f32.gmra.mrb[0].mxu0 %v585
    %v692 = vpop.f32.mrb[0].mxu0
    %v693 = vadd.f32 0.0, %v692
    %v694 = vpop.f32.mrb[0].mxu0
    %695 = vmatprep.mubr.f32.mxu0 0.0
    %696 = vmatmul.mubr.f32.gmra.mrb[0].mxu0 %v588
    %v697 = vpop.f32.mrb[0].mxu0
    %v698 = vadd.f32 0.0, %v697
    %v699 = vpop.f32.mrb[0].mxu0
    %700 = vmatprep.mubr.f32.mxu0 0.0
    %701 = vmatmul.mubr.f32.gmra.mrb[0].mxu0 %v591
    %v702 = vpop.f32.mrb[0].mxu0
    %v703 = vadd.f32 0.0, %v702
    %v704 = vpop.f32.mrb[0].mxu0
    %705 = vmatprep.mubr.f32.mxu0 0.0
    %706 = vmatmul.mubr.f32.gmra.mrb[0].mxu0 %v594
    %v707 = vpop.f32.mrb[0].mxu0
    %v708 = vadd.f32 0.0, %v707
    %v709 = vpop.f32.mrb[0].mxu0
    %710 = vmatprep.mubr.f32.mxu0 0.0
    %711 = vmatmul.mubr.f32.gmra.mrb[0].mxu0 %v597
    %v712 = vpop.f32.mrb[0].mxu0
    %v713 = vadd.f32 0.0, %v712
    %v714 = vpop.f32.mrb[0].mxu0
    %715 = vmatprep.mubr.f32.mxu0 0.0
    %716 = vmatmul.mubr.f32.gmra.mrb[0].mxu0 %v600
    %v717 = vpop.f32.mrb[0].mxu0
    %v718 = vadd.f32 0.0, %v717
    %v719 = vpop.f32.mrb[0].mxu0
    %720 = vmatprep.mubr.f32.mxu0 0.0
    %721 = vmatmul.mubr.f32.gmra.mrb[0].mxu0 %v603
    %v722 = vpop.f32.mrb[0].mxu0
    %v723 = vadd.f32 0.0, %v722
    %v724 = vpop.f32.mrb[0].mxu0
    %725 = vmatprep.mubr.f32.mxu0 0.0
    %726 = vmatmul.mubr.f32.gmra.mrb[0].mxu0 %v606
    %v727 = vpop.f32.mrb[0].mxu0
    %v728 = vadd.f32 0.0, %v727
    %v729 = vpop.f32.mrb[0].mxu0
    %730 = vmatprep.mubr.f32.mxu0 0.0
    %731 = vmatmul.mubr.f32.gmra.mrb[0].mxu0 %v609
    %v732 = vpop.f32.mrb[0].mxu0
    %v733 = vadd.f32 0.0, %v732
    %v734 = vpop.f32.mrb[0].mxu0
    %735 = vmatprep.mubr.f32.mxu0 0.0
    %736 = vmatmul.mubr.f32.gmra.mrb[0].mxu0 %v612
    %v737 = vpop.f32.mrb[0].mxu0
    %v738 = vadd.f32 0.0, %v737
    %v739 = vpop.f32.mrb[0].mxu0
    %740 = vmatprep.mubr.f32.mxu0 0.0
    %741 = vmatmul.mubr.f32.gmra.mrb[0].mxu0 %v615
    %v742 = vpop.f32.mrb[0].mxu0
    %v743 = vadd.f32 0.0, %v742
    %v744 = vpop.f32.mrb[0].mxu0
    %745 = vmatprep.mubr.f32.mxu0 0.0
    %746 = vmatmul.mubr.f32.gmra.mrb[0].mxu0 %v618
    %v747 = vpop.f32.mrb[0].mxu0
    %v748 = vadd.f32 0.0, %v747
    %v749 = vpop.f32.mrb[0].mxu0
    %750 = vmatprep.mubr.f32.mxu0 0.0
    %751 = vmatmul.mubr.f32.gmra.mrb[0].mxu0 %v621
    %v752 = vpop.f32.mrb[0].mxu0
    %v753 = vadd.f32 0.0, %v752
    %v754 = vpop.f32.mrb[0].mxu0
    %755 = vmatprep.mubr.f32.mxu0 0.0
    %756 = vmatmul.mubr.f32.gmra.mrb[0].mxu0 %v624
    %v757 = vpop.f32.mrb[0].mxu0
    %v758 = vadd.f32 0.0, %v757
    %v759 = vpop.f32.mrb[0].mxu0
    %760 = vdwg.mxu0
    %v762 = vsel %vm583, %v260, 0
    %v765 = vsel %vm583, %v261, 0
    %v768 = vsel %vm583, %v262, 0
    %v771 = vsel %vm583, %v263, 0
    %v774 = vsel %vm583, %v264, 0
    %v777 = vsel %vm583, %v265, 0
    %v780 = vsel %vm583, %v266, 0
    %v783 = vsel %vm583, %v267, 0
    %v786 = vsel %vm583, %v268, 0
    %v789 = vsel %vm583, %v269, 0
    %v792 = vsel %vm583, %v270, 0
    %v795 = vsel %vm583, %v271, 0
    %v798 = vsel %vm583, %v272, 0
    %v801 = vsel %vm583, %v273, 0
    %803 = vmatprep.subr.mxu0 0.0
    %804 = vmatpush1.msra.mxu0 %v387
    %805 = vmatprep.subr.mxu0 0.0
    %806 = vmatpush1.msra.mxu0 %v392
    %807 = vmatprep.subr.mxu0 0.0
    %808 = vmatpush1.msra.mxu0 0.0
    %809 = vmatprep.subr.mxu0 0.0
    %810 = vmatpush1.msra.mxu0 0.0
    %811 = vmatprep.subr.mxu0 0.0
    %812 = vmatpush1.msra.mxu0 0.0
    %813 = vmatprep.subr.mxu0 0.0
    %814 = vmatpush1.msra.mxu0 0.0
    %815 = vmatprep.subr.mxu0 0.0
    %816 = vmatpush1.msra.mxu0 0.0
    %817 = vmatprep.subr.mxu0 0.0
    %818 = vmatpush1.msra.mxu0 0.0
    %819 = vmatprep.subr.mxu0 0.0
    %820 = vmatpush1.msra.mxu0 0.0
    %821 = vmatprep.subr.mxu0 0.0
    %822 = vmatpush1.msra.mxu0 0.0
    %823 = vmatprep.subr.mxu0 0.0
    %824 = vmatpush1.msra.mxu0 0.0
    %825 = vmatprep.subr.mxu0 0.0
    %826 = vmatpush1.msra.mxu0 0.0
    %827 = vmatprep.subr.mxu0 0.0
    %828 = vmatpush1.msra.mxu0 0.0
    %829 = vmatprep.subr.mxu0 0.0
    %830 = vmatpush1.msra.mxu0 0.0
    %831 = vmatprep.subr.mxu0 0.0
    %832 = vmatpush1.msra.mxu0 0.0
    %833 = vmatprep.subr.mxu0 0.0
    %834 = vmatpush1.msra.mxu0 0.0
    %835 = vmatprep.subr.mxu0 0.0
    %836 = vmatpush1.msra.mxu0 0.0
    %837 = vmatprep.subr.mxu0 0.0
    %838 = vmatpush1.msra.mxu0 0.0
    %839 = vmatprep.subr.mxu0 0.0
    %840 = vmatpush1.msra.mxu0 0.0
    %841 = vmatprep.subr.mxu0 0.0
    %842 = vmatpush1.msra.mxu0 0.0
    %843 = vmatprep.subr.mxu0 0.0
    %844 = vmatpush1.msra.mxu0 0.0
    %845 = vmatprep.subr.mxu0 0.0
    %846 = vmatpush1.msra.mxu0 0.0
    %847 = vmatprep.subr.mxu0 0.0
    %848 = vmatpush1.msra.mxu0 0.0
    %849 = vmatprep.subr.mxu0 0.0
    %850 = vmatpush1.msra.mxu0 0.0
    %851 = vmatprep.subr.mxu0 0.0
    %852 = vmatpush1.msra.mxu0 0.0
    %853 = vmatprep.subr.mxu0 0.0
    %854 = vmatpush1.msra.mxu0 0.0
    %855 = vmatprep.subr.mxu0 0.0
    %856 = vmatpush1.msra.mxu0 0.0
    %857 = vmatprep.subr.mxu0 0.0
    %858 = vmatpush1.msra.mxu0 0.0
    %859 = vmatprep.subr.mxu0 0.0
    %860 = vmatpush1.msra.mxu0 0.0
    %861 = vmatprep.subr.mxu0 0.0
    %862 = vmatpush1.msra.mxu0 0.0
    %863 = vmatprep.subr.mxu0 0.0
    %864 = vmatpush1.msra.mxu0 0.0
    %865 = vmatprep.subr.mxu0 0.0
    %866 = vmatpush1.msra.mxu0 0.0
    %867 = vmatprep.mubr.f32.mxu0 0.0
    %868 = vmatmul.mubr.f32.gmra.mrb[0].mxu0 %v762
    %v869 = vpop.f32.mrb[0].mxu0
    %v870 = vadd.f32 0.0, %v869
    %v871 = vpop.f32.mrb[0].mxu0
    %872 = vmatprep.mubr.f32.mxu0 0.0
    %873 = vmatmul.mubr.f32.gmra.mrb[0].mxu0 %v765
    %v874 = vpop.f32.mrb[0].mxu0
    %v875 = vadd.f32 0.0, %v874
    %v876 = vpop.f32.mrb[0].mxu0
    %877 = vmatprep.mubr.f32.mxu0 0.0
    %878 = vmatmul.mubr.f32.gmra.mrb[0].mxu0 %v768
    %v879 = vpop.f32.mrb[0].mxu0
    %v880 = vadd.f32 0.0, %v879
    %v881 = vpop.f32.mrb[0].mxu0
    %882 = vmatprep.mubr.f32.mxu0 0.0
    %883 = vmatmul.mubr.f32.gmra.mrb[0].mxu0 %v771
    %v884 = vpop.f32.mrb[0].mxu0
    %v885 = vadd.f32 0.0, %v884
    %v886 = vpop.f32.mrb[0].mxu0
    %887 = vmatprep.mubr.f32.mxu0 0.0
    %888 = vmatmul.mubr.f32.gmra.mrb[0].mxu0 %v774
    %v889 = vpop.f32.mrb[0].mxu0
    %v890 = vadd.f32 0.0, %v889
    %v891 = vpop.f32.mrb[0].mxu0
    %892 = vmatprep.mubr.f32.mxu0 0.0
    %893 = vmatmul.mubr.f32.gmra.mrb[0].mxu0 %v777
    %v894 = vpop.f32.mrb[0].mxu0
    %v895 = vadd.f32 0.0, %v894
    %v896 = vpop.f32.mrb[0].mxu0
    %897 = vmatprep.mubr.f32.mxu0 0.0
    %898 = vmatmul.mubr.f32.gmra.mrb[0].mxu0 %v780
    %v899 = vpop.f32.mrb[0].mxu0
    %v900 = vadd.f32 0.0, %v899
    %v901 = vpop.f32.mrb[0].mxu0
    %902 = vmatprep.mubr.f32.mxu0 0.0
    %903 = vmatmul.mubr.f32.gmra.mrb[0].mxu0 %v783
    %v904 = vpop.f32.mrb[0].mxu0
    %v905 = vadd.f32 0.0, %v904
    %v906 = vpop.f32.mrb[0].mxu0
    %907 = vmatprep.mubr.f32.mxu0 0.0
    %908 = vmatmul.mubr.f32.gmra.mrb[0].mxu0 %v786
    %v909 = vpop.f32.mrb[0].mxu0
    %v910 = vadd.f32 0.0, %v909
    %v911 = vpop.f32.mrb[0].mxu0
    %912 = vmatprep.mubr.f32.mxu0 0.0
    %913 = vmatmul.mubr.f32.gmra.mrb[0].mxu0 %v789
    %v914 = vpop.f32.mrb[0].mxu0
    %v915 = vadd.f32 0.0, %v914
    %v916 = vpop.f32.mrb[0].mxu0
    %917 = vmatprep.mubr.f32.mxu0 0.0
    %918 = vmatmul.mubr.f32.gmra.mrb[0].mxu0 %v792
    %v919 = vpop.f32.mrb[0].mxu0
    %v920 = vadd.f32 0.0, %v919
    %v921 = vpop.f32.mrb[0].mxu0
    %922 = vmatprep.mubr.f32.mxu0 0.0
    %923 = vmatmul.mubr.f32.gmra.mrb[0].mxu0 %v795
    %v924 = vpop.f32.mrb[0].mxu0
    %v925 = vadd.f32 0.0, %v924
    %v926 = vpop.f32.mrb[0].mxu0
    %927 = vmatprep.mubr.f32.mxu0 0.0
    %928 = vmatmul.mubr.f32.gmra.mrb[0].mxu0 %v798
    %v929 = vpop.f32.mrb[0].mxu0
    %v930 = vadd.f32 0.0, %v929
    %v931 = vpop.f32.mrb[0].mxu0
    %932 = vmatprep.mubr.f32.mxu0 0.0
    %933 = vmatmul.mubr.f32.gmra.mrb[0].mxu0 %v801
    %v934 = vpop.f32.mrb[0].mxu0
    %v935 = vadd.f32 0.0, %v934
    %v936 = vpop.f32.mrb[0].mxu0
    %937 = vdwg.mxu0
    %v938 = vxor.u32 %v232, 2147483648
    %v939 = vxor.u32 %v233, 2147483648
    %v940 = vxor.u32 %v234, 2147483648
    %v941 = vxor.u32 %v235, 2147483648
    %v942 = vxor.u32 %v236, 2147483648
    %v943 = vxor.u32 %v237, 2147483648
    %v944 = vxor.u32 %v238, 2147483648
    %v945 = vxor.u32 %v239, 2147483648
    %v946 = vxor.u32 %v240, 2147483648
    %v947 = vxor.u32 %v241, 2147483648
    %v948 = vxor.u32 %v242, 2147483648
    %v949 = vxor.u32 %v243, 2147483648
    %v950 = vxor.u32 %v244, 2147483648
    %v951 = vxor.u32 %v245, 2147483648
    %v952 = vmul.f32 %v938, 1.442695
    %v953 = vpow.pop %v952
    %v954 = vmul.f32 %v939, 1.442695
    %v955 = vpow.pop %v954
    %v956 = vmul.f32 %v940, 1.442695
    %v957 = vpow.pop %v956
    %v958 = vmul.f32 %v941, 1.442695
    %v959 = vpow.pop %v958
    %v960 = vmul.f32 %v942, 1.442695
    %v961 = vpow.pop %v960
    %v962 = vmul.f32 %v943, 1.442695
    %v963 = vpow.pop %v962
    %v964 = vmul.f32 %v944, 1.442695
    %v965 = vpow.pop %v964
    %v966 = vmul.f32 %v945, 1.442695
    %v967 = vpow.pop %v966
    %v968 = vmul.f32 %v946, 1.442695
    %v969 = vpow.pop %v968
    %v970 = vmul.f32 %v947, 1.442695
    %v971 = vpow.pop %v970
    %v972 = vmul.f32 %v948, 1.442695
    %v973 = vpow.pop %v972
    %v974 = vmul.f32 %v949, 1.442695
    %v975 = vpow.pop %v974
    %v976 = vmul.f32 %v950, 1.442695
    %v977 = vpow.pop %v976
    %v978 = vmul.f32 %v951, 1.442695
    %v979 = vpow.pop %v978
    %v980 = vadd.f32 %v953, 1.0
    %v981 = vadd.f32 %v955, 1.0
    %v982 = vadd.f32 %v957, 1.0
    %v983 = vadd.f32 %v959, 1.0
    %v984 = vadd.f32 %v961, 1.0
    %v985 = vadd.f32 %v963, 1.0
    %v986 = vadd.f32 %v965, 1.0
    %v987 = vadd.f32 %v967, 1.0
    %v988 = vadd.f32 %v969, 1.0
    %v989 = vadd.f32 %v971, 1.0
    %v990 = vadd.f32 %v973, 1.0
    %v991 = vadd.f32 %v975, 1.0
    %v992 = vadd.f32 %v977, 1.0
    %v993 = vadd.f32 %v979, 1.0
    %v994 = vrcp.pop %v980
    %v995 = vmul.f32 1.0, %v994
    %v996 = vrcp.pop %v981
    %v997 = vmul.f32 1.0, %v996
    %v998 = vrcp.pop %v982
    %v999 = vmul.f32 1.0, %v998
    %v1000 = vrcp.pop %v983
    %v1001 = vmul.f32 1.0, %v1000
    %v1002 = vrcp.pop %v984
    %v1003 = vmul.f32 1.0, %v1002
    %v1004 = vrcp.pop %v985
    %v1005 = vmul.f32 1.0, %v1004
    %v1006 = vrcp.pop %v986
    %v1007 = vmul.f32 1.0, %v1006
    %v1008 = vrcp.pop %v987
    %v1009 = vmul.f32 1.0, %v1008
    %v1010 = vrcp.pop %v988
    %v1011 = vmul.f32 1.0, %v1010
    %v1012 = vrcp.pop %v989
    %v1013 = vmul.f32 1.0, %v1012
    %v1014 = vrcp.pop %v990
    %v1015 = vmul.f32 1.0, %v1014
    %v1016 = vrcp.pop %v991
    %v1017 = vmul.f32 1.0, %v1016
    %v1018 = vrcp.pop %v992
    %v1019 = vmul.f32 1.0, %v1018
    %v1020 = vrcp.pop %v993
    %v1021 = vmul.f32 1.0, %v1020
    %1036 = vrot.lane.b32.xlu0 %v693, 96
    %v1037 = vpop.permute.xlu0 %1036
    %1038 = vrot.lane.b32.xlu0 %v698, 96
    %v1039 = vpop.permute.xlu0 %1038
    %1040 = vrot.lane.b32.xlu0 %v703, 96
    %v1041 = vpop.permute.xlu0 %1040
    %1042 = vrot.lane.b32.xlu0 %v708, 96
    %v1043 = vpop.permute.xlu0 %1042
    %1044 = vrot.lane.b32.xlu0 %v713, 96
    %v1045 = vpop.permute.xlu0 %1044
    %1046 = vrot.lane.b32.xlu0 %v718, 96
    %v1047 = vpop.permute.xlu0 %1046
    %1048 = vrot.lane.b32.xlu0 %v723, 96
    %v1049 = vpop.permute.xlu0 %1048
    %1050 = vrot.lane.b32.xlu0 %v728, 96
    %v1051 = vpop.permute.xlu0 %1050
    %1052 = vrot.lane.b32.xlu0 %v733, 96
    %v1053 = vpop.permute.xlu0 %1052
    %1054 = vrot.lane.b32.xlu0 %v738, 96
    %v1055 = vpop.permute.xlu0 %1054
    %1056 = vrot.lane.b32.xlu0 %v743, 96
    %v1057 = vpop.permute.xlu0 %1056
    %1058 = vrot.lane.b32.xlu0 %v748, 96
    %v1059 = vpop.permute.xlu0 %1058
    %1060 = vrot.lane.b32.xlu0 %v753, 96
    %v1061 = vpop.permute.xlu0 %1060
    %1062 = vrot.lane.b32.xlu0 %v758, 96
    %v1063 = vpop.permute.xlu0 %1062
    %v1078 = vmul.f32 %v995, %v1037
    %v1079 = vmul.f32 %v997, %v1039
    %v1080 = vmul.f32 %v999, %v1041
    %v1081 = vmul.f32 %v1001, %v1043
    %v1082 = vmul.f32 %v1003, %v1045
    %v1083 = vmul.f32 %v1005, %v1047
    %v1084 = vmul.f32 %v1007, %v1049
    %v1085 = vmul.f32 %v1009, %v1051
    %v1086 = vmul.f32 %v1011, %v1053
    %v1087 = vmul.f32 %v1013, %v1055
    %v1088 = vmul.f32 %v1015, %v1057
    %v1089 = vmul.f32 %v1017, %v1059
    %v1090 = vmul.f32 %v1019, %v1061
    %v1091 = vmul.f32 %v1021, %v1063
    %1092 = vxpose.xlu0.b32.start [1/16] %v260, 128
    %1093 = vxpose.xlu0.b32.cont [2/16] %v261, 128
    %1094 = vxpose.xlu0.b32.cont [3/16] %v262, 128
    %1095 = vxpose.xlu0.b32.cont [4/16] %v263, 128
    %1096 = vxpose.xlu0.b32.cont [5/16] %v264, 128
    %1097 = vxpose.xlu0.b32.cont [6/16] %v265, 128
    %1098 = vxpose.xlu0.b32.cont [7/16] %v266, 128
    %1099 = vxpose.xlu0.b32.cont [8/16] %v267, 128
    %1100 = vxpose.xlu0.b32.cont [9/16] %v268, 128
    %1101 = vxpose.xlu0.b32.cont [10/16] %v269, 128
    %1102 = vxpose.xlu0.b32.cont [11/16] %v270, 128
    %1103 = vxpose.xlu0.b32.cont [12/16] %v271, 128
    %1104 = vxpose.xlu0.b32.cont [13/16] %v272, 128
    %1105 = vxpose.xlu0.b32.cont [14/16] %v273, 128
    %1106 = vxpose.xlu0.b32.cont [15/16] 0.0, 128
    %1107 = vxpose.xlu0.b32.end [16/16] 0.0, 128
    %v1108 = vpop.trf.xlu0
    %v1109 = vpop.trf.xlu0
    %v1110 = vpop.trf.xlu0
    %v1111 = vpop.trf.xlu0
    %v1112 = vpop.trf.xlu0
    %v1113 = vpop.trf.xlu0
    %v1114 = vpop.trf.xlu0
    %v1115 = vpop.trf.xlu0
    %v1116 = vpop.trf.xlu0
    %v1117 = vpop.trf.xlu0
    %v1118 = vpop.trf.xlu0
    %v1119 = vpop.trf.xlu0
    %v1120 = vpop.trf.xlu0
    %v1121 = vpop.trf.xlu0
    %v1122 = vpop.trf.xlu0
    %v1123 = vpop.trf.xlu0
    %vm1124 = vcmask 916480
    %v1126 = vsel %vm1124, %v1108, 0
    %v1129 = vsel %vm1124, %v1109, 0
    %1131 = vmatprep.subr.mxu0 0.0
    %1132 = vmatpush1.msra.mxu0 %v1078
    %1133 = vmatprep.subr.mxu0 0.0
    %1134 = vmatpush1.msra.mxu0 %v1079
    %1135 = vmatprep.subr.mxu0 0.0
    %1136 = vmatpush1.msra.mxu0 %v1080
    %1137 = vmatprep.subr.mxu0 0.0
    %1138 = vmatpush1.msra.mxu0 %v1081
    %1139 = vmatprep.subr.mxu0 0.0
    %1140 = vmatpush1.msra.mxu0 %v1082
    %1141 = vmatprep.subr.mxu0 0.0
    %1142 = vmatpush1.msra.mxu0 %v1083
    %1143 = vmatprep.subr.mxu0 0.0
    %1144 = vmatpush1.msra.mxu0 %v1084
    %1145 = vmatprep.subr.mxu0 0.0
    %1146 = vmatpush1.msra.mxu0 %v1085
    %1147 = vmatprep.subr.mxu0 0.0
    %1148 = vmatpush1.msra.mxu0 %v1086
    %1149 = vmatprep.subr.mxu0 0.0
    %1150 = vmatpush1.msra.mxu0 %v1087
    %1151 = vmatprep.subr.mxu0 0.0
    %1152 = vmatpush1.msra.mxu0 %v1088
    %1153 = vmatprep.subr.mxu0 0.0
    %1154 = vmatpush1.msra.mxu0 %v1089
    %1155 = vmatprep.subr.mxu0 0.0
    %1156 = vmatpush1.msra.mxu0 %v1090
    %1157 = vmatprep.subr.mxu0 0.0
    %1158 = vmatpush1.msra.mxu0 %v1091
    %1159 = vmatprep.subr.mxu0 0.0
    %1160 = vmatpush1.msra.mxu0 0.0
    %1161 = vmatprep.subr.mxu0 0.0
    %1162 = vmatpush1.msra.mxu0 0.0
    %1163 = vmatprep.subr.mxu0 0.0
    %1164 = vmatpush1.msra.mxu0 0.0
    %1165 = vmatprep.subr.mxu0 0.0
    %1166 = vmatpush1.msra.mxu0 0.0
    %1167 = vmatprep.subr.mxu0 0.0
    %1168 = vmatpush1.msra.mxu0 0.0
    %1169 = vmatprep.subr.mxu0 0.0
    %1170 = vmatpush1.msra.mxu0 0.0
    %1171 = vmatprep.subr.mxu0 0.0
    %1172 = vmatpush1.msra.mxu0 0.0
    %1173 = vmatprep.subr.mxu0 0.0
    %1174 = vmatpush1.msra.mxu0 0.0
    %1175 = vmatprep.subr.mxu0 0.0
    %1176 = vmatpush1.msra.mxu0 0.0
    %1177 = vmatprep.subr.mxu0 0.0
    %1178 = vmatpush1.msra.mxu0 0.0
    %1179 = vmatprep.subr.mxu0 0.0
    %1180 = vmatpush1.msra.mxu0 0.0
    %1181 = vmatprep.subr.mxu0 0.0
    %1182 = vmatpush1.msra.mxu0 0.0
    %1183 = vmatprep.subr.mxu0 0.0
    %1184 = vmatpush1.msra.mxu0 0.0
    %1185 = vmatprep.subr.mxu0 0.0
    %1186 = vmatpush1.msra.mxu0 0.0
    %1187 = vmatprep.subr.mxu0 0.0
    %1188 = vmatpush1.msra.mxu0 0.0
    %1189 = vmatprep.subr.mxu0 0.0
    %1190 = vmatpush1.msra.mxu0 0.0
    %1191 = vmatprep.subr.mxu0 0.0
    %1192 = vmatpush1.msra.mxu0 0.0
    %1193 = vmatprep.subr.mxu0 0.0
    %1194 = vmatpush1.msra.mxu0 0.0
    %1195 = vmatprep.mubr.f32.mxu0 0.0
    %1196 = vmatmul.mubr.f32.gmra.mrb[0].mxu0 %v1126
    %v1197 = vpop.f32.mrb[0].mxu0
    %v1198 = vadd.f32 0.0, %v1197
    %v1199 = vpop.f32.mrb[0].mxu0
    %1200 = vmatprep.mubr.f32.mxu0 0.0
    %1201 = vmatmul.mubr.f32.gmra.mrb[0].mxu0 %v1129
    %v1202 = vpop.f32.mrb[0].mxu0
    %v1203 = vadd.f32 0.0, %v1202
    %v1204 = vpop.f32.mrb[0].mxu0
    %1205 = vdwg.mxu0
    %v1206 = vadd.f32 %v387, %v1198
    %v1207 = vadd.f32 %v392, %v1203
    %v1208 = vld [vmem:[%s13] sm:$0x1]
    %v1209 = vld [vmem:[%s14] sm:$0x1]
    %v1210 = vsel %vm313, %v1206, 0.0
    %v1211 = vsel %vm313, %v1207, 0.0
    %v1212 = vadd.f32 %v1210, %v1211
    %v1213 = vrot.slane %v1212, 4
    %v1214 = vadd.f32 %v1212, %v1213
    %v1215 = vrot.slane %v1214, 2
    %v1216 = vadd.f32 %v1214, %v1215
    %v1217 = vrot.slane %v1216, 1
    %v1218 = vadd.f32 %v1216, %v1217
    %v1219 = vrcp.pop 16.0
    %v1220 = vmul.f32 %v1218, %v1219
    %v1221 = vsub.f32 %v1206, %v1220
    %v1222 = vsub.f32 %v1207, %v1220
    %v1223 = vmul.f32 %v1221, %v1221
    %v1224 = vmul.f32 %v1222, %v1222
    %v1225 = vsel %vm313, %v1223, 0.0
    %v1226 = vsel %vm313, %v1224, 0.0
    %v1227 = vadd.f32 %v1225, %v1226
    %v1228 = vrot.slane %v1227, 4
    %v1229 = vadd.f32 %v1227, %v1228
    %v1230 = vrot.slane %v1229, 2
    %v1231 = vadd.f32 %v1229, %v1230
    %v1232 = vrot.slane %v1231, 1
    %v1233 = vadd.f32 %v1231, %v1232
    %v1234 = vmul.f32 %v1233, %v1219
    %v1235 = vadd.f32 %v1234, 1e-05
    %v1236 = vrsqrt.pop %v1235
    %v1237 = vmul.f32 %v1221, %v1236
    %v1238 = vmul.f32 %v1222, %v1236
    %v1240 = vlaneseq
    %v1241 = vshrl.u32 %v1240, 7
    %v1242 = vsub.s32 0, %v1241
    %v1243 = vrot.slane %v1208, %v1242
    %v1245 = vmul.f32 %v1237, %v1243
    %v1246 = vmul.f32 %v1238, %v1243
    %v1248 = vlaneseq
    %v1249 = vshrl.u32 %v1248, 7
    %v1250 = vsub.s32 0, %v1249
    %v1251 = vrot.slane %v1209, %v1250
    %v1253 = vadd.f32 %v1245, %v1251
    %v1254 = vadd.f32 %v1246, %v1251
    %v1255 = vmax.f32 %v1253, 0.0
    %v1256 = vmax.f32 %v1254, 0.0
    %v1257 = vadd.f32 %v104, %v1255
    %v1258 = vadd.f32 %v105, %v1256
    %1273 = vrot.lane.b32.xlu0 %v870, 64
    %v1274 = vpop.permute.xlu0 %1273
    %1275 = vrot.lane.b32.xlu0 %v875, 64
    %v1276 = vpop.permute.xlu0 %1275
    %1277 = vrot.lane.b32.xlu0 %v880, 64
    %v1278 = vpop.permute.xlu0 %1277
    %1279 = vrot.lane.b32.xlu0 %v885, 64
    %v1280 = vpop.permute.xlu0 %1279
    %1281 = vrot.lane.b32.xlu0 %v890, 64
    %v1282 = vpop.permute.xlu0 %1281
    %1283 = vrot.lane.b32.xlu0 %v895, 64
    %v1284 = vpop.permute.xlu0 %1283
    %1285 = vrot.lane.b32.xlu0 %v900, 64
    %v1286 = vpop.permute.xlu0 %1285
    %1287 = vrot.lane.b32.xlu0 %v905, 64
    %v1288 = vpop.permute.xlu0 %1287
    %1289 = vrot.lane.b32.xlu0 %v910, 64
    %v1290 = vpop.permute.xlu0 %1289
    %1291 = vrot.lane.b32.xlu0 %v915, 64
    %v1292 = vpop.permute.xlu0 %1291
    %1293 = vrot.lane.b32.xlu0 %v920, 64
    %v1294 = vpop.permute.xlu0 %1293
    %1295 = vrot.lane.b32.xlu0 %v925, 64
    %v1296 = vpop.permute.xlu0 %1295
    %1297 = vrot.lane.b32.xlu0 %v930, 64
    %v1298 = vpop.permute.xlu0 %1297
    %1299 = vrot.lane.b32.xlu0 %v935, 64
    %v1300 = vpop.permute.xlu0 %1299
    %v1315 = vadd.f32 %v515, %v1274
    %v1316 = vadd.f32 %v520, %v1276
    %v1317 = vadd.f32 %v525, %v1278
    %v1318 = vadd.f32 %v530, %v1280
    %v1319 = vadd.f32 %v535, %v1282
    %v1320 = vadd.f32 %v540, %v1284
    %v1321 = vadd.f32 %v545, %v1286
    %v1322 = vadd.f32 %v550, %v1288
    %v1323 = vadd.f32 %v555, %v1290
    %v1324 = vadd.f32 %v560, %v1292
    %v1325 = vadd.f32 %v565, %v1294
    %v1326 = vadd.f32 %v570, %v1296
    %v1327 = vadd.f32 %v575, %v1298
    %v1328 = vadd.f32 %v580, %v1300
    %1329 = vrot.lane.b32.xlu0 %v693, 32
    %v1330 = vpop.permute.xlu0 %1329
    %1331 = vrot.lane.b32.xlu0 %v698, 32
    %v1332 = vpop.permute.xlu0 %1331
    %1333 = vrot.lane.b32.xlu0 %v703, 32
    %v1334 = vpop.permute.xlu0 %1333
    %1335 = vrot.lane.b32.xlu0 %v708, 32
    %v1336 = vpop.permute.xlu0 %1335
    %1337 = vrot.lane.b32.xlu0 %v713, 32
    %v1338 = vpop.permute.xlu0 %1337
    %1339 = vrot.lane.b32.xlu0 %v718, 32
    %v1340 = vpop.permute.xlu0 %1339
    %1341 = vrot.lane.b32.xlu0 %v723, 32
    %v1342 = vpop.permute.xlu0 %1341
    %1343 = vrot.lane.b32.xlu0 %v728, 32
    %v1344 = vpop.permute.xlu0 %1343
    %1345 = vrot.lane.b32.xlu0 %v733, 32
    %v1346 = vpop.permute.xlu0 %1345
    %1347 = vrot.lane.b32.xlu0 %v738, 32
    %v1348 = vpop.permute.xlu0 %1347
    %1349 = vrot.lane.b32.xlu0 %v743, 32
    %v1350 = vpop.permute.xlu0 %1349
    %1351 = vrot.lane.b32.xlu0 %v748, 32
    %v1352 = vpop.permute.xlu0 %1351
    %1353 = vrot.lane.b32.xlu0 %v753, 32
    %v1354 = vpop.permute.xlu0 %1353
    %1355 = vrot.lane.b32.xlu0 %v758, 32
    %v1356 = vpop.permute.xlu0 %1355
    %v1371 = vadd.f32 %v1315, %v1330
    %v1372 = vadd.f32 %v1316, %v1332
    %v1373 = vadd.f32 %v1317, %v1334
    %v1374 = vadd.f32 %v1318, %v1336
    %v1375 = vadd.f32 %v1319, %v1338
    %v1376 = vadd.f32 %v1320, %v1340
    %v1377 = vadd.f32 %v1321, %v1342
    %v1378 = vadd.f32 %v1322, %v1344
    %v1379 = vadd.f32 %v1323, %v1346
    %v1380 = vadd.f32 %v1324, %v1348
    %v1381 = vadd.f32 %v1325, %v1350
    %v1382 = vadd.f32 %v1326, %v1352
    %v1383 = vadd.f32 %v1327, %v1354
    %v1384 = vadd.f32 %v1328, %v1356
    %v1385 = vld [vmem:[%s15] sm:$0x1]
    %v1386 = vld [vmem:[%s16] sm:$0x1]
    %v1387 = vsel %vm313, %v1371, 0.0
    %v1388 = vsel %vm313, %v1372, 0.0
    %v1389 = vadd.f32 %v1387, %v1388
    %v1390 = vsel %vm313, %v1373, 0.0
    %v1391 = vadd.f32 %v1389, %v1390
    %v1392 = vsel %vm313, %v1374, 0.0
    %v1393 = vadd.f32 %v1391, %v1392
    %v1394 = vsel %vm313, %v1375, 0.0
    %v1395 = vadd.f32 %v1393, %v1394
    %v1396 = vsel %vm313, %v1376, 0.0
    %v1397 = vadd.f32 %v1395, %v1396
    %v1398 = vsel %vm313, %v1377, 0.0
    %v1399 = vadd.f32 %v1397, %v1398
    %v1400 = vsel %vm313, %v1378, 0.0
    %v1401 = vadd.f32 %v1399, %v1400
    %v1402 = vsel %vm313, %v1379, 0.0
    %v1403 = vadd.f32 %v1401, %v1402
    %v1404 = vsel %vm313, %v1380, 0.0
    %v1405 = vadd.f32 %v1403, %v1404
    %v1406 = vsel %vm313, %v1381, 0.0
    %v1407 = vadd.f32 %v1405, %v1406
    %v1408 = vsel %vm313, %v1382, 0.0
    %v1409 = vadd.f32 %v1407, %v1408
    %v1410 = vsel %vm313, %v1383, 0.0
    %v1411 = vadd.f32 %v1409, %v1410
    %v1412 = vsel %vm313, %v1384, 0.0
    %v1413 = vadd.f32 %v1411, %v1412
    %v1414 = vrot.slane %v1413, 4
    %v1415 = vadd.f32 %v1413, %v1414
    %v1416 = vrot.slane %v1415, 2
    %v1417 = vadd.f32 %v1415, %v1416
    %v1418 = vrot.slane %v1417, 1
    %v1419 = vadd.f32 %v1417, %v1418
    %v1420 = vrcp.pop 112.0
    %v1421 = vmul.f32 %v1419, %v1420
    %v1422 = vsub.f32 %v1371, %v1421
    %v1423 = vsub.f32 %v1372, %v1421
    %v1424 = vsub.f32 %v1373, %v1421
    %v1425 = vsub.f32 %v1374, %v1421
    %v1426 = vsub.f32 %v1375, %v1421
    %v1427 = vsub.f32 %v1376, %v1421
    %v1428 = vsub.f32 %v1377, %v1421
    %v1429 = vsub.f32 %v1378, %v1421
    %v1430 = vsub.f32 %v1379, %v1421
    %v1431 = vsub.f32 %v1380, %v1421
    %v1432 = vsub.f32 %v1381, %v1421
    %v1433 = vsub.f32 %v1382, %v1421
    %v1434 = vsub.f32 %v1383, %v1421
    %v1435 = vsub.f32 %v1384, %v1421
    %v1436 = vmul.f32 %v1422, %v1422
    %v1437 = vmul.f32 %v1423, %v1423
    %v1438 = vmul.f32 %v1424, %v1424
    %v1439 = vmul.f32 %v1425, %v1425
    %v1440 = vmul.f32 %v1426, %v1426
    %v1441 = vmul.f32 %v1427, %v1427
    %v1442 = vmul.f32 %v1428, %v1428
    %v1443 = vmul.f32 %v1429, %v1429
    %v1444 = vmul.f32 %v1430, %v1430
    %v1445 = vmul.f32 %v1431, %v1431
    %v1446 = vmul.f32 %v1432, %v1432
    %v1447 = vmul.f32 %v1433, %v1433
    %v1448 = vmul.f32 %v1434, %v1434
    %v1449 = vmul.f32 %v1435, %v1435
    %v1450 = vsel %vm313, %v1436, 0.0
    %v1451 = vsel %vm313, %v1437, 0.0
    %v1452 = vadd.f32 %v1450, %v1451
    %v1453 = vsel %vm313, %v1438, 0.0
    %v1454 = vadd.f32 %v1452, %v1453
    %v1455 = vsel %vm313, %v1439, 0.0
    %v1456 = vadd.f32 %v1454, %v1455
    %v1457 = vsel %vm313, %v1440, 0.0
    %v1458 = vadd.f32 %v1456, %v1457
    %v1459 = vsel %vm313, %v1441, 0.0
    %v1460 = vadd.f32 %v1458, %v1459
    %v1461 = vsel %vm313, %v1442, 0.0
    %v1462 = vadd.f32 %v1460, %v1461
    %v1463 = vsel %vm313, %v1443, 0.0
    %v1464 = vadd.f32 %v1462, %v1463
    %v1465 = vsel %vm313, %v1444, 0.0
    %v1466 = vadd.f32 %v1464, %v1465
    %v1467 = vsel %vm313, %v1445, 0.0
    %v1468 = vadd.f32 %v1466, %v1467
    %v1469 = vsel %vm313, %v1446, 0.0
    %v1470 = vadd.f32 %v1468, %v1469
    %v1471 = vsel %vm313, %v1447, 0.0
    %v1472 = vadd.f32 %v1470, %v1471
    %v1473 = vsel %vm313, %v1448, 0.0
    %v1474 = vadd.f32 %v1472, %v1473
    %v1475 = vsel %vm313, %v1449, 0.0
    %v1476 = vadd.f32 %v1474, %v1475
    %v1477 = vrot.slane %v1476, 4
    %v1478 = vadd.f32 %v1476, %v1477
    %v1479 = vrot.slane %v1478, 2
    %v1480 = vadd.f32 %v1478, %v1479
    %v1481 = vrot.slane %v1480, 1
    %v1482 = vadd.f32 %v1480, %v1481
    %v1483 = vmul.f32 %v1482, %v1420
    %v1484 = vadd.f32 %v1483, 1e-05
    %v1485 = vrsqrt.pop %v1484
    %v1486 = vmul.f32 %v1422, %v1485
    %v1487 = vmul.f32 %v1423, %v1485
    %v1488 = vmul.f32 %v1424, %v1485
    %v1489 = vmul.f32 %v1425, %v1485
    %v1490 = vmul.f32 %v1426, %v1485
    %v1491 = vmul.f32 %v1427, %v1485
    %v1492 = vmul.f32 %v1428, %v1485
    %v1493 = vmul.f32 %v1429, %v1485
    %v1494 = vmul.f32 %v1430, %v1485
    %v1495 = vmul.f32 %v1431, %v1485
    %v1496 = vmul.f32 %v1432, %v1485
    %v1497 = vmul.f32 %v1433, %v1485
    %v1498 = vmul.f32 %v1434, %v1485
    %v1499 = vmul.f32 %v1435, %v1485
    %v1501 = vlaneseq
    %v1502 = vshrl.u32 %v1501, 7
    %v1503 = vsub.s32 0, %v1502
    %v1504 = vrot.slane %v1385, %v1503
    %v1506 = vmul.f32 %v1486, %v1504
    %v1507 = vmul.f32 %v1487, %v1504
    %v1508 = vmul.f32 %v1488, %v1504
    %v1509 = vmul.f32 %v1489, %v1504
    %v1510 = vmul.f32 %v1490, %v1504
    %v1511 = vmul.f32 %v1491, %v1504
    %v1512 = vmul.f32 %v1492, %v1504
    %v1513 = vmul.f32 %v1493, %v1504
    %v1514 = vmul.f32 %v1494, %v1504
    %v1515 = vmul.f32 %v1495, %v1504
    %v1516 = vmul.f32 %v1496, %v1504
    %v1517 = vmul.f32 %v1497, %v1504
    %v1518 = vmul.f32 %v1498, %v1504
    %v1519 = vmul.f32 %v1499, %v1504
    %v1521 = vlaneseq
    %v1522 = vshrl.u32 %v1521, 7
    %v1523 = vsub.s32 0, %v1522
    %v1524 = vrot.slane %v1386, %v1523
    %v1526 = vadd.f32 %v1506, %v1524
    %v1527 = vadd.f32 %v1507, %v1524
    %v1528 = vadd.f32 %v1508, %v1524
    %v1529 = vadd.f32 %v1509, %v1524
    %v1530 = vadd.f32 %v1510, %v1524
    %v1531 = vadd.f32 %v1511, %v1524
    %v1532 = vadd.f32 %v1512, %v1524
    %v1533 = vadd.f32 %v1513, %v1524
    %v1534 = vadd.f32 %v1514, %v1524
    %v1535 = vadd.f32 %v1515, %v1524
    %v1536 = vadd.f32 %v1516, %v1524
    %v1537 = vadd.f32 %v1517, %v1524
    %v1538 = vadd.f32 %v1518, %v1524
    %v1539 = vadd.f32 %v1519, %v1524
    %v1540 = vmax.f32 %v1526, 0.0
    %v1541 = vmax.f32 %v1527, 0.0
    %v1542 = vmax.f32 %v1528, 0.0
    %v1543 = vmax.f32 %v1529, 0.0
    %v1544 = vmax.f32 %v1530, 0.0
    %v1545 = vmax.f32 %v1531, 0.0
    %v1546 = vmax.f32 %v1532, 0.0
    %v1547 = vmax.f32 %v1533, 0.0
    %v1548 = vmax.f32 %v1534, 0.0
    %v1549 = vmax.f32 %v1535, 0.0
    %v1550 = vmax.f32 %v1536, 0.0
    %v1551 = vmax.f32 %v1537, 0.0
    %v1552 = vmax.f32 %v1538, 0.0
    %v1553 = vmax.f32 %v1539, 0.0
    %v1554 = vadd.f32 %v232, %v1540
    %v1555 = vadd.f32 %v233, %v1541
    %v1556 = vadd.f32 %v234, %v1542
    %v1557 = vadd.f32 %v235, %v1543
    %v1558 = vadd.f32 %v236, %v1544
    %v1559 = vadd.f32 %v237, %v1545
    %v1560 = vadd.f32 %v238, %v1546
    %v1561 = vadd.f32 %v239, %v1547
    %v1562 = vadd.f32 %v240, %v1548
    %v1563 = vadd.f32 %v241, %v1549
    %v1564 = vadd.f32 %v242, %v1550
    %v1565 = vadd.f32 %v243, %v1551
    %v1566 = vadd.f32 %v244, %v1552
    %v1567 = vadd.f32 %v245, %v1553
    %s1568 = scalar_lea.vmem %s9, 32
    %v1569 = vld [vmem:[%s1568] sm:$0xff]
    %v1570 = vld [vmem:[%s1568 + $0x8] sm:$0xff]
    %v1571 = vld [vmem:[%s1568 + $0x10] sm:$0xff]
    %v1572 = vld [vmem:[%s1568 + $0x18] sm:$0xff]
    %s1573 = scalar_lea.vmem %s10, 1
    %v1574 = vld [vmem:[%s1573] sm:$0x1]
    %v1576 = vlaneseq
    %v1577 = vshrl.u32 %v1576, 7
    %v1578 = vsub.s32 0, %v1577
    %v1579 = vrot.slane %v1574, %v1578
    %v1582 = vsel %vm313, %v1257, 0
    %v1585 = vsel %vm313, %v1258, 0
    %1587 = vmatprep.subr.mxu0 0.0
    %1588 = vmatpush1.msra.mxu0 %v1569
    %1589 = vmatprep.subr.mxu0 0.0
    %1590 = vmatpush1.msra.mxu0 %v1570
    %1591 = vmatprep.subr.mxu0 0.0
    %1592 = vmatpush1.msra.mxu0 %v1571
    %1593 = vmatprep.subr.mxu0 0.0
    %1594 = vmatpush1.msra.mxu0 %v1572
    %1595 = vmatprep.subr.mxu0 0.0
    %1596 = vmatpush1.msra.mxu0 0.0
    %1597 = vmatprep.subr.mxu0 0.0
    %1598 = vmatpush1.msra.mxu0 0.0
    %1599 = vmatprep.subr.mxu0 0.0
    %1600 = vmatpush1.msra.mxu0 0.0
    %1601 = vmatprep.subr.mxu0 0.0
    %1602 = vmatpush1.msra.mxu0 0.0
    %1603 = vmatprep.subr.mxu0 0.0
    %1604 = vmatpush1.msra.mxu0 0.0
    %1605 = vmatprep.subr.mxu0 0.0
    %1606 = vmatpush1.msra.mxu0 0.0
    %1607 = vmatprep.subr.mxu0 0.0
    %1608 = vmatpush1.msra.mxu0 0.0
    %1609 = vmatprep.subr.mxu0 0.0
    %1610 = vmatpush1.msra.mxu0 0.0
    %1611 = vmatprep.subr.mxu0 0.0
    %1612 = vmatpush1.msra.mxu0 0.0
    %1613 = vmatprep.subr.mxu0 0.0
    %1614 = vmatpush1.msra.mxu0 0.0
    %1615 = vmatprep.subr.mxu0 0.0
    %1616 = vmatpush1.msra.mxu0 0.0
    %1617 = vmatprep.subr.mxu0 0.0
    %1618 = vmatpush1.msra.mxu0 0.0
    %1619 = vmatprep.subr.mxu0 0.0
    %1620 = vmatpush1.msra.mxu0 0.0
    %1621 = vmatprep.subr.mxu0 0.0
    %1622 = vmatpush1.msra.mxu0 0.0
    %1623 = vmatprep.subr.mxu0 0.0
    %1624 = vmatpush1.msra.mxu0 0.0
    %1625 = vmatprep.subr.mxu0 0.0
    %1626 = vmatpush1.msra.mxu0 0.0
    %1627 = vmatprep.subr.mxu0 0.0
    %1628 = vmatpush1.msra.mxu0 0.0
    %1629 = vmatprep.subr.mxu0 0.0
    %1630 = vmatpush1.msra.mxu0 0.0
    %1631 = vmatprep.subr.mxu0 0.0
    %1632 = vmatpush1.msra.mxu0 0.0
    %1633 = vmatprep.subr.mxu0 0.0
    %1634 = vmatpush1.msra.mxu0 0.0
    %1635 = vmatprep.subr.mxu0 0.0
    %1636 = vmatpush1.msra.mxu0 0.0
    %1637 = vmatprep.subr.mxu0 0.0
    %1638 = vmatpush1.msra.mxu0 0.0
    %1639 = vmatprep.subr.mxu0 0.0
    %1640 = vmatpush1.msra.mxu0 0.0
    %1641 = vmatprep.subr.mxu0 0.0
    %1642 = vmatpush1.msra.mxu0 0.0
    %1643 = vmatprep.subr.mxu0 0.0
    %1644 = vmatpush1.msra.mxu0 0.0
    %1645 = vmatprep.subr.mxu0 0.0
    %1646 = vmatpush1.msra.mxu0 0.0
    %1647 = vmatprep.subr.mxu0 0.0
    %1648 = vmatpush1.msra.mxu0 0.0
    %1649 = vmatprep.subr.mxu0 0.0
    %1650 = vmatpush1.msra.mxu0 0.0
    %1651 = vmatprep.mubr.f32.mxu0 0.0
    %1652 = vmatmul.mubr.f32.gmra.mrb[0].mxu0 %v1582
    %v1653 = vpop.f32.mrb[0].mxu0
    %v1654 = vadd.f32 %v1579, %v1653
    %v1655 = vpop.f32.mrb[0].mxu0
    %1656 = vmatprep.mubr.f32.mxu0 0.0
    %1657 = vmatmul.mubr.f32.gmra.mrb[0].mxu0 %v1585
    %v1658 = vpop.f32.mrb[0].mxu0
    %v1659 = vadd.f32 %v1579, %v1658
    %v1660 = vpop.f32.mrb[0].mxu0
    %1661 = vdwg.mxu0
    %s1662 = scalar_lea.vmem %s11, 32
    %v1663 = vld [vmem:[%s1662] sm:$0xff]
    %v1664 = vld [vmem:[%s1662 + $0x8] sm:$0xff]
    %v1665 = vld [vmem:[%s1662 + $0x10] sm:$0xff]
    %v1666 = vld [vmem:[%s1662 + $0x18] sm:$0xff]
    %s1667 = scalar_lea.vmem %s12, 1
    %v1668 = vld [vmem:[%s1667] sm:$0x1]
    %v1670 = vlaneseq
    %v1671 = vshrl.u32 %v1670, 7
    %v1672 = vsub.s32 0, %v1671
    %v1673 = vrot.slane %v1668, %v1672
    %v1676 = vsel %vm313, %v1554, 0
    %v1679 = vsel %vm313, %v1555, 0
    %v1682 = vsel %vm313, %v1556, 0
    %v1685 = vsel %vm313, %v1557, 0
    %v1688 = vsel %vm313, %v1558, 0
    %v1691 = vsel %vm313, %v1559, 0
    %v1694 = vsel %vm313, %v1560, 0
    %v1697 = vsel %vm313, %v1561, 0
    %v1700 = vsel %vm313, %v1562, 0
    %v1703 = vsel %vm313, %v1563, 0
    %v1706 = vsel %vm313, %v1564, 0
    %v1709 = vsel %vm313, %v1565, 0
    %v1712 = vsel %vm313, %v1566, 0
    %v1715 = vsel %vm313, %v1567, 0
    %1717 = vmatprep.subr.mxu0 0.0
    %1718 = vmatpush1.msra.mxu0 %v1663
    %1719 = vmatprep.subr.mxu0 0.0
    %1720 = vmatpush1.msra.mxu0 %v1664
    %1721 = vmatprep.subr.mxu0 0.0
    %1722 = vmatpush1.msra.mxu0 %v1665
    %1723 = vmatprep.subr.mxu0 0.0
    %1724 = vmatpush1.msra.mxu0 %v1666
    %1725 = vmatprep.subr.mxu0 0.0
    %1726 = vmatpush1.msra.mxu0 0.0
    %1727 = vmatprep.subr.mxu0 0.0
    %1728 = vmatpush1.msra.mxu0 0.0
    %1729 = vmatprep.subr.mxu0 0.0
    %1730 = vmatpush1.msra.mxu0 0.0
    %1731 = vmatprep.subr.mxu0 0.0
    %1732 = vmatpush1.msra.mxu0 0.0
    %1733 = vmatprep.subr.mxu0 0.0
    %1734 = vmatpush1.msra.mxu0 0.0
    %1735 = vmatprep.subr.mxu0 0.0
    %1736 = vmatpush1.msra.mxu0 0.0
    %1737 = vmatprep.subr.mxu0 0.0
    %1738 = vmatpush1.msra.mxu0 0.0
    %1739 = vmatprep.subr.mxu0 0.0
    %1740 = vmatpush1.msra.mxu0 0.0
    %1741 = vmatprep.subr.mxu0 0.0
    %1742 = vmatpush1.msra.mxu0 0.0
    %1743 = vmatprep.subr.mxu0 0.0
    %1744 = vmatpush1.msra.mxu0 0.0
    %1745 = vmatprep.subr.mxu0 0.0
    %1746 = vmatpush1.msra.mxu0 0.0
    %1747 = vmatprep.subr.mxu0 0.0
    %1748 = vmatpush1.msra.mxu0 0.0
    %1749 = vmatprep.subr.mxu0 0.0
    %1750 = vmatpush1.msra.mxu0 0.0
    %1751 = vmatprep.subr.mxu0 0.0
    %1752 = vmatpush1.msra.mxu0 0.0
    %1753 = vmatprep.subr.mxu0 0.0
    %1754 = vmatpush1.msra.mxu0 0.0
    %1755 = vmatprep.subr.mxu0 0.0
    %1756 = vmatpush1.msra.mxu0 0.0
    %1757 = vmatprep.subr.mxu0 0.0
    %1758 = vmatpush1.msra.mxu0 0.0
    %1759 = vmatprep.subr.mxu0 0.0
    %1760 = vmatpush1.msra.mxu0 0.0
    %1761 = vmatprep.subr.mxu0 0.0
    %1762 = vmatpush1.msra.mxu0 0.0
    %1763 = vmatprep.subr.mxu0 0.0
    %1764 = vmatpush1.msra.mxu0 0.0
    %1765 = vmatprep.subr.mxu0 0.0
    %1766 = vmatpush1.msra.mxu0 0.0
    %1767 = vmatprep.subr.mxu0 0.0
    %1768 = vmatpush1.msra.mxu0 0.0
    %1769 = vmatprep.subr.mxu0 0.0
    %1770 = vmatpush1.msra.mxu0 0.0
    %1771 = vmatprep.subr.mxu0 0.0
    %1772 = vmatpush1.msra.mxu0 0.0
    %1773 = vmatprep.subr.mxu0 0.0
    %1774 = vmatpush1.msra.mxu0 0.0
    %1775 = vmatprep.subr.mxu0 0.0
    %1776 = vmatpush1.msra.mxu0 0.0
    %1777 = vmatprep.subr.mxu0 0.0
    %1778 = vmatpush1.msra.mxu0 0.0
    %1779 = vmatprep.subr.mxu0 0.0
    %1780 = vmatpush1.msra.mxu0 0.0
    %1781 = vmatprep.mubr.f32.mxu0 0.0
    %1782 = vmatmul.mubr.f32.gmra.mrb[0].mxu0 %v1676
    %v1783 = vpop.f32.mrb[0].mxu0
    %v1784 = vadd.f32 %v1673, %v1783
    %v1785 = vpop.f32.mrb[0].mxu0
    %1786 = vmatprep.mubr.f32.mxu0 0.0
    %1787 = vmatmul.mubr.f32.gmra.mrb[0].mxu0 %v1679
    %v1788 = vpop.f32.mrb[0].mxu0
    %v1789 = vadd.f32 %v1673, %v1788
    %v1790 = vpop.f32.mrb[0].mxu0
    %1791 = vmatprep.mubr.f32.mxu0 0.0
    %1792 = vmatmul.mubr.f32.gmra.mrb[0].mxu0 %v1682
    %v1793 = vpop.f32.mrb[0].mxu0
    %v1794 = vadd.f32 %v1673, %v1793
    %v1795 = vpop.f32.mrb[0].mxu0
    %1796 = vmatprep.mubr.f32.mxu0 0.0
    %1797 = vmatmul.mubr.f32.gmra.mrb[0].mxu0 %v1685
    %v1798 = vpop.f32.mrb[0].mxu0
    %v1799 = vadd.f32 %v1673, %v1798
    %v1800 = vpop.f32.mrb[0].mxu0
    %1801 = vmatprep.mubr.f32.mxu0 0.0
    %1802 = vmatmul.mubr.f32.gmra.mrb[0].mxu0 %v1688
    %v1803 = vpop.f32.mrb[0].mxu0
    %v1804 = vadd.f32 %v1673, %v1803
    %v1805 = vpop.f32.mrb[0].mxu0
    %1806 = vmatprep.mubr.f32.mxu0 0.0
    %1807 = vmatmul.mubr.f32.gmra.mrb[0].mxu0 %v1691
    %v1808 = vpop.f32.mrb[0].mxu0
    %v1809 = vadd.f32 %v1673, %v1808
    %v1810 = vpop.f32.mrb[0].mxu0
    %1811 = vmatprep.mubr.f32.mxu0 0.0
    %1812 = vmatmul.mubr.f32.gmra.mrb[0].mxu0 %v1694
    %v1813 = vpop.f32.mrb[0].mxu0
    %v1814 = vadd.f32 %v1673, %v1813
    %v1815 = vpop.f32.mrb[0].mxu0
    %1816 = vmatprep.mubr.f32.mxu0 0.0
    %1817 = vmatmul.mubr.f32.gmra.mrb[0].mxu0 %v1697
    %v1818 = vpop.f32.mrb[0].mxu0
    %v1819 = vadd.f32 %v1673, %v1818
    %v1820 = vpop.f32.mrb[0].mxu0
    %1821 = vmatprep.mubr.f32.mxu0 0.0
    %1822 = vmatmul.mubr.f32.gmra.mrb[0].mxu0 %v1700
    %v1823 = vpop.f32.mrb[0].mxu0
    %v1824 = vadd.f32 %v1673, %v1823
    %v1825 = vpop.f32.mrb[0].mxu0
    %1826 = vmatprep.mubr.f32.mxu0 0.0
    %1827 = vmatmul.mubr.f32.gmra.mrb[0].mxu0 %v1703
    %v1828 = vpop.f32.mrb[0].mxu0
    %v1829 = vadd.f32 %v1673, %v1828
    %v1830 = vpop.f32.mrb[0].mxu0
    %1831 = vmatprep.mubr.f32.mxu0 0.0
    %1832 = vmatmul.mubr.f32.gmra.mrb[0].mxu0 %v1706
    %v1833 = vpop.f32.mrb[0].mxu0
    %v1834 = vadd.f32 %v1673, %v1833
    %v1835 = vpop.f32.mrb[0].mxu0
    %1836 = vmatprep.mubr.f32.mxu0 0.0
    %1837 = vmatmul.mubr.f32.gmra.mrb[0].mxu0 %v1709
    %v1838 = vpop.f32.mrb[0].mxu0
    %v1839 = vadd.f32 %v1673, %v1838
    %v1840 = vpop.f32.mrb[0].mxu0
    %1841 = vmatprep.mubr.f32.mxu0 0.0
    %1842 = vmatmul.mubr.f32.gmra.mrb[0].mxu0 %v1712
    %v1843 = vpop.f32.mrb[0].mxu0
    %v1844 = vadd.f32 %v1673, %v1843
    %v1845 = vpop.f32.mrb[0].mxu0
    %1846 = vmatprep.mubr.f32.mxu0 0.0
    %1847 = vmatmul.mubr.f32.gmra.mrb[0].mxu0 %v1715
    %v1848 = vpop.f32.mrb[0].mxu0
    %v1849 = vadd.f32 %v1673, %v1848
    %v1850 = vpop.f32.mrb[0].mxu0
    %1851 = vdwg.mxu0
    %1852 = vmatprep.subr.mxu0 0.0
    %1853 = vmatpush1.msra.mxu0 %v1654
    %1854 = vmatprep.subr.mxu0 0.0
    %1855 = vmatpush1.msra.mxu0 %v1659
    %1856 = vmatprep.subr.mxu0 0.0
    %1857 = vmatpush1.msra.mxu0 0.0
    %1858 = vmatprep.subr.mxu0 0.0
    %1859 = vmatpush1.msra.mxu0 0.0
    %1860 = vmatprep.subr.mxu0 0.0
    %1861 = vmatpush1.msra.mxu0 0.0
    %1862 = vmatprep.subr.mxu0 0.0
    %1863 = vmatpush1.msra.mxu0 0.0
    %1864 = vmatprep.subr.mxu0 0.0
    %1865 = vmatpush1.msra.mxu0 0.0
    %1866 = vmatprep.subr.mxu0 0.0
    %1867 = vmatpush1.msra.mxu0 0.0
    %1868 = vmatprep.subr.mxu0 0.0
    %1869 = vmatpush1.msra.mxu0 0.0
    %1870 = vmatprep.subr.mxu0 0.0
    %1871 = vmatpush1.msra.mxu0 0.0
    %1872 = vmatprep.subr.mxu0 0.0
    %1873 = vmatpush1.msra.mxu0 0.0
    %1874 = vmatprep.subr.mxu0 0.0
    %1875 = vmatpush1.msra.mxu0 0.0
    %1876 = vmatprep.subr.mxu0 0.0
    %1877 = vmatpush1.msra.mxu0 0.0
    %1878 = vmatprep.subr.mxu0 0.0
    %1879 = vmatpush1.msra.mxu0 0.0
    %1880 = vmatprep.subr.mxu0 0.0
    %1881 = vmatpush1.msra.mxu0 0.0
    %1882 = vmatprep.subr.mxu0 0.0
    %1883 = vmatpush1.msra.mxu0 0.0
    %1884 = vmatprep.subr.mxu0 0.0
    %1885 = vmatpush1.msra.mxu0 0.0
    %1886 = vmatprep.subr.mxu0 0.0
    %1887 = vmatpush1.msra.mxu0 0.0
    %1888 = vmatprep.subr.mxu0 0.0
    %1889 = vmatpush1.msra.mxu0 0.0
    %1890 = vmatprep.subr.mxu0 0.0
    %1891 = vmatpush1.msra.mxu0 0.0
    %1892 = vmatprep.subr.mxu0 0.0
    %1893 = vmatpush1.msra.mxu0 0.0
    %1894 = vmatprep.subr.mxu0 0.0
    %1895 = vmatpush1.msra.mxu0 0.0
    %1896 = vmatprep.subr.mxu0 0.0
    %1897 = vmatpush1.msra.mxu0 0.0
    %1898 = vmatprep.subr.mxu0 0.0
    %1899 = vmatpush1.msra.mxu0 0.0
    %1900 = vmatprep.subr.mxu0 0.0
    %1901 = vmatpush1.msra.mxu0 0.0
    %1902 = vmatprep.subr.mxu0 0.0
    %1903 = vmatpush1.msra.mxu0 0.0
    %1904 = vmatprep.subr.mxu0 0.0
    %1905 = vmatpush1.msra.mxu0 0.0
    %1906 = vmatprep.subr.mxu0 0.0
    %1907 = vmatpush1.msra.mxu0 0.0
    %1908 = vmatprep.subr.mxu0 0.0
    %1909 = vmatpush1.msra.mxu0 0.0
    %1910 = vmatprep.subr.mxu0 0.0
    %1911 = vmatpush1.msra.mxu0 0.0
    %1912 = vmatprep.subr.mxu0 0.0
    %1913 = vmatpush1.msra.mxu0 0.0
    %1914 = vmatprep.subr.mxu0 0.0
    %1915 = vmatpush1.msra.mxu0 0.0
    %1916 = vmatprep.mubr.f32.mxu0 0.0
    %1917 = vmatmul.mubr.f32.gmra.mrb[0].mxu0 %v585
    %v1918 = vpop.f32.mrb[0].mxu0
    %v1919 = vadd.f32 0.0, %v1918
    %v1920 = vpop.f32.mrb[0].mxu0
    %1921 = vmatprep.mubr.f32.mxu0 0.0
    %1922 = vmatmul.mubr.f32.gmra.mrb[0].mxu0 %v588
    %v1923 = vpop.f32.mrb[0].mxu0
    %v1924 = vadd.f32 0.0, %v1923
    %v1925 = vpop.f32.mrb[0].mxu0
    %1926 = vmatprep.mubr.f32.mxu0 0.0
    %1927 = vmatmul.mubr.f32.gmra.mrb[0].mxu0 %v591
    %v1928 = vpop.f32.mrb[0].mxu0
    %v1929 = vadd.f32 0.0, %v1928
    %v1930 = vpop.f32.mrb[0].mxu0
    %1931 = vmatprep.mubr.f32.mxu0 0.0
    %1932 = vmatmul.mubr.f32.gmra.mrb[0].mxu0 %v594
    %v1933 = vpop.f32.mrb[0].mxu0
    %v1934 = vadd.f32 0.0, %v1933
    %v1935 = vpop.f32.mrb[0].mxu0
    %1936 = vmatprep.mubr.f32.mxu0 0.0
    %1937 = vmatmul.mubr.f32.gmra.mrb[0].mxu0 %v597
    %v1938 = vpop.f32.mrb[0].mxu0
    %v1939 = vadd.f32 0.0, %v1938
    %v1940 = vpop.f32.mrb[0].mxu0
    %1941 = vmatprep.mubr.f32.mxu0 0.0
    %1942 = vmatmul.mubr.f32.gmra.mrb[0].mxu0 %v600
    %v1943 = vpop.f32.mrb[0].mxu0
    %v1944 = vadd.f32 0.0, %v1943
    %v1945 = vpop.f32.mrb[0].mxu0
    %1946 = vmatprep.mubr.f32.mxu0 0.0
    %1947 = vmatmul.mubr.f32.gmra.mrb[0].mxu0 %v603
    %v1948 = vpop.f32.mrb[0].mxu0
    %v1949 = vadd.f32 0.0, %v1948
    %v1950 = vpop.f32.mrb[0].mxu0
    %1951 = vmatprep.mubr.f32.mxu0 0.0
    %1952 = vmatmul.mubr.f32.gmra.mrb[0].mxu0 %v606
    %v1953 = vpop.f32.mrb[0].mxu0
    %v1954 = vadd.f32 0.0, %v1953
    %v1955 = vpop.f32.mrb[0].mxu0
    %1956 = vmatprep.mubr.f32.mxu0 0.0
    %1957 = vmatmul.mubr.f32.gmra.mrb[0].mxu0 %v609
    %v1958 = vpop.f32.mrb[0].mxu0
    %v1959 = vadd.f32 0.0, %v1958
    %v1960 = vpop.f32.mrb[0].mxu0
    %1961 = vmatprep.mubr.f32.mxu0 0.0
    %1962 = vmatmul.mubr.f32.gmra.mrb[0].mxu0 %v612
    %v1963 = vpop.f32.mrb[0].mxu0
    %v1964 = vadd.f32 0.0, %v1963
    %v1965 = vpop.f32.mrb[0].mxu0
    %1966 = vmatprep.mubr.f32.mxu0 0.0
    %1967 = vmatmul.mubr.f32.gmra.mrb[0].mxu0 %v615
    %v1968 = vpop.f32.mrb[0].mxu0
    %v1969 = vadd.f32 0.0, %v1968
    %v1970 = vpop.f32.mrb[0].mxu0
    %1971 = vmatprep.mubr.f32.mxu0 0.0
    %1972 = vmatmul.mubr.f32.gmra.mrb[0].mxu0 %v618
    %v1973 = vpop.f32.mrb[0].mxu0
    %v1974 = vadd.f32 0.0, %v1973
    %v1975 = vpop.f32.mrb[0].mxu0
    %1976 = vmatprep.mubr.f32.mxu0 0.0
    %1977 = vmatmul.mubr.f32.gmra.mrb[0].mxu0 %v621
    %v1978 = vpop.f32.mrb[0].mxu0
    %v1979 = vadd.f32 0.0, %v1978
    %v1980 = vpop.f32.mrb[0].mxu0
    %1981 = vmatprep.mubr.f32.mxu0 0.0
    %1982 = vmatmul.mubr.f32.gmra.mrb[0].mxu0 %v624
    %v1983 = vpop.f32.mrb[0].mxu0
    %v1984 = vadd.f32 0.0, %v1983
    %v1985 = vpop.f32.mrb[0].mxu0
    %1986 = vdwg.mxu0
    %1987 = vmatprep.subr.mxu0 0.0
    %1988 = vmatpush1.msra.mxu0 %v1654
    %1989 = vmatprep.subr.mxu0 0.0
    %1990 = vmatpush1.msra.mxu0 %v1659
    %1991 = vmatprep.subr.mxu0 0.0
    %1992 = vmatpush1.msra.mxu0 0.0
    %1993 = vmatprep.subr.mxu0 0.0
    %1994 = vmatpush1.msra.mxu0 0.0
    %1995 = vmatprep.subr.mxu0 0.0
    %1996 = vmatpush1.msra.mxu0 0.0
    %1997 = vmatprep.subr.mxu0 0.0
    %1998 = vmatpush1.msra.mxu0 0.0
    %1999 = vmatprep.subr.mxu0 0.0
    %2000 = vmatpush1.msra.mxu0 0.0
    %2001 = vmatprep.subr.mxu0 0.0
    %2002 = vmatpush1.msra.mxu0 0.0
    %2003 = vmatprep.subr.mxu0 0.0
    %2004 = vmatpush1.msra.mxu0 0.0
    %2005 = vmatprep.subr.mxu0 0.0
    %2006 = vmatpush1.msra.mxu0 0.0
    %2007 = vmatprep.subr.mxu0 0.0
    %2008 = vmatpush1.msra.mxu0 0.0
    %2009 = vmatprep.subr.mxu0 0.0
    %2010 = vmatpush1.msra.mxu0 0.0
    %2011 = vmatprep.subr.mxu0 0.0
    %2012 = vmatpush1.msra.mxu0 0.0
    %2013 = vmatprep.subr.mxu0 0.0
    %2014 = vmatpush1.msra.mxu0 0.0
    %2015 = vmatprep.subr.mxu0 0.0
    %2016 = vmatpush1.msra.mxu0 0.0
    %2017 = vmatprep.subr.mxu0 0.0
    %2018 = vmatpush1.msra.mxu0 0.0
    %2019 = vmatprep.subr.mxu0 0.0
    %2020 = vmatpush1.msra.mxu0 0.0
    %2021 = vmatprep.subr.mxu0 0.0
    %2022 = vmatpush1.msra.mxu0 0.0
    %2023 = vmatprep.subr.mxu0 0.0
    %2024 = vmatpush1.msra.mxu0 0.0
    %2025 = vmatprep.subr.mxu0 0.0
    %2026 = vmatpush1.msra.mxu0 0.0
    %2027 = vmatprep.subr.mxu0 0.0
    %2028 = vmatpush1.msra.mxu0 0.0
    %2029 = vmatprep.subr.mxu0 0.0
    %2030 = vmatpush1.msra.mxu0 0.0
    %2031 = vmatprep.subr.mxu0 0.0
    %2032 = vmatpush1.msra.mxu0 0.0
    %2033 = vmatprep.subr.mxu0 0.0
    %2034 = vmatpush1.msra.mxu0 0.0
    %2035 = vmatprep.subr.mxu0 0.0
    %2036 = vmatpush1.msra.mxu0 0.0
    %2037 = vmatprep.subr.mxu0 0.0
    %2038 = vmatpush1.msra.mxu0 0.0
    %2039 = vmatprep.subr.mxu0 0.0
    %2040 = vmatpush1.msra.mxu0 0.0
    %2041 = vmatprep.subr.mxu0 0.0
    %2042 = vmatpush1.msra.mxu0 0.0
    %2043 = vmatprep.subr.mxu0 0.0
    %2044 = vmatpush1.msra.mxu0 0.0
    %2045 = vmatprep.subr.mxu0 0.0
    %2046 = vmatpush1.msra.mxu0 0.0
    %2047 = vmatprep.subr.mxu0 0.0
    %2048 = vmatpush1.msra.mxu0 0.0
    %2049 = vmatprep.subr.mxu0 0.0
    %2050 = vmatpush1.msra.mxu0 0.0
    %2051 = vmatprep.mubr.f32.mxu0 0.0
    %2052 = vmatmul.mubr.f32.gmra.mrb[0].mxu0 %v762
    %v2053 = vpop.f32.mrb[0].mxu0
    %v2054 = vadd.f32 0.0, %v2053
    %v2055 = vpop.f32.mrb[0].mxu0
    %2056 = vmatprep.mubr.f32.mxu0 0.0
    %2057 = vmatmul.mubr.f32.gmra.mrb[0].mxu0 %v765
    %v2058 = vpop.f32.mrb[0].mxu0
    %v2059 = vadd.f32 0.0, %v2058
    %v2060 = vpop.f32.mrb[0].mxu0
    %2061 = vmatprep.mubr.f32.mxu0 0.0
    %2062 = vmatmul.mubr.f32.gmra.mrb[0].mxu0 %v768
    %v2063 = vpop.f32.mrb[0].mxu0
    %v2064 = vadd.f32 0.0, %v2063
    %v2065 = vpop.f32.mrb[0].mxu0
    %2066 = vmatprep.mubr.f32.mxu0 0.0
    %2067 = vmatmul.mubr.f32.gmra.mrb[0].mxu0 %v771
    %v2068 = vpop.f32.mrb[0].mxu0
    %v2069 = vadd.f32 0.0, %v2068
    %v2070 = vpop.f32.mrb[0].mxu0
    %2071 = vmatprep.mubr.f32.mxu0 0.0
    %2072 = vmatmul.mubr.f32.gmra.mrb[0].mxu0 %v774
    %v2073 = vpop.f32.mrb[0].mxu0
    %v2074 = vadd.f32 0.0, %v2073
    %v2075 = vpop.f32.mrb[0].mxu0
    %2076 = vmatprep.mubr.f32.mxu0 0.0
    %2077 = vmatmul.mubr.f32.gmra.mrb[0].mxu0 %v777
    %v2078 = vpop.f32.mrb[0].mxu0
    %v2079 = vadd.f32 0.0, %v2078
    %v2080 = vpop.f32.mrb[0].mxu0
    %2081 = vmatprep.mubr.f32.mxu0 0.0
    %2082 = vmatmul.mubr.f32.gmra.mrb[0].mxu0 %v780
    %v2083 = vpop.f32.mrb[0].mxu0
    %v2084 = vadd.f32 0.0, %v2083
    %v2085 = vpop.f32.mrb[0].mxu0
    %2086 = vmatprep.mubr.f32.mxu0 0.0
    %2087 = vmatmul.mubr.f32.gmra.mrb[0].mxu0 %v783
    %v2088 = vpop.f32.mrb[0].mxu0
    %v2089 = vadd.f32 0.0, %v2088
    %v2090 = vpop.f32.mrb[0].mxu0
    %2091 = vmatprep.mubr.f32.mxu0 0.0
    %2092 = vmatmul.mubr.f32.gmra.mrb[0].mxu0 %v786
    %v2093 = vpop.f32.mrb[0].mxu0
    %v2094 = vadd.f32 0.0, %v2093
    %v2095 = vpop.f32.mrb[0].mxu0
    %2096 = vmatprep.mubr.f32.mxu0 0.0
    %2097 = vmatmul.mubr.f32.gmra.mrb[0].mxu0 %v789
    %v2098 = vpop.f32.mrb[0].mxu0
    %v2099 = vadd.f32 0.0, %v2098
    %v2100 = vpop.f32.mrb[0].mxu0
    %2101 = vmatprep.mubr.f32.mxu0 0.0
    %2102 = vmatmul.mubr.f32.gmra.mrb[0].mxu0 %v792
    %v2103 = vpop.f32.mrb[0].mxu0
    %v2104 = vadd.f32 0.0, %v2103
    %v2105 = vpop.f32.mrb[0].mxu0
    %2106 = vmatprep.mubr.f32.mxu0 0.0
    %2107 = vmatmul.mubr.f32.gmra.mrb[0].mxu0 %v795
    %v2108 = vpop.f32.mrb[0].mxu0
    %v2109 = vadd.f32 0.0, %v2108
    %v2110 = vpop.f32.mrb[0].mxu0
    %2111 = vmatprep.mubr.f32.mxu0 0.0
    %2112 = vmatmul.mubr.f32.gmra.mrb[0].mxu0 %v798
    %v2113 = vpop.f32.mrb[0].mxu0
    %v2114 = vadd.f32 0.0, %v2113
    %v2115 = vpop.f32.mrb[0].mxu0
    %2116 = vmatprep.mubr.f32.mxu0 0.0
    %2117 = vmatmul.mubr.f32.gmra.mrb[0].mxu0 %v801
    %v2118 = vpop.f32.mrb[0].mxu0
    %v2119 = vadd.f32 0.0, %v2118
    %v2120 = vpop.f32.mrb[0].mxu0
    %2121 = vdwg.mxu0
    %2136 = vrot.lane.b32.xlu0 %v2054, 64
    %v2137 = vpop.permute.xlu0 %2136
    %2138 = vrot.lane.b32.xlu0 %v2059, 64
    %v2139 = vpop.permute.xlu0 %2138
    %2140 = vrot.lane.b32.xlu0 %v2064, 64
    %v2141 = vpop.permute.xlu0 %2140
    %2142 = vrot.lane.b32.xlu0 %v2069, 64
    %v2143 = vpop.permute.xlu0 %2142
    %2144 = vrot.lane.b32.xlu0 %v2074, 64
    %v2145 = vpop.permute.xlu0 %2144
    %2146 = vrot.lane.b32.xlu0 %v2079, 64
    %v2147 = vpop.permute.xlu0 %2146
    %2148 = vrot.lane.b32.xlu0 %v2084, 64
    %v2149 = vpop.permute.xlu0 %2148
    %2150 = vrot.lane.b32.xlu0 %v2089, 64
    %v2151 = vpop.permute.xlu0 %2150
    %2152 = vrot.lane.b32.xlu0 %v2094, 64
    %v2153 = vpop.permute.xlu0 %2152
    %2154 = vrot.lane.b32.xlu0 %v2099, 64
    %v2155 = vpop.permute.xlu0 %2154
    %2156 = vrot.lane.b32.xlu0 %v2104, 64
    %v2157 = vpop.permute.xlu0 %2156
    %2158 = vrot.lane.b32.xlu0 %v2109, 64
    %v2159 = vpop.permute.xlu0 %2158
    %2160 = vrot.lane.b32.xlu0 %v2114, 64
    %v2161 = vpop.permute.xlu0 %2160
    %2162 = vrot.lane.b32.xlu0 %v2119, 64
    %v2163 = vpop.permute.xlu0 %2162
    %v2178 = vadd.f32 %v1784, %v2137
    %v2179 = vadd.f32 %v1789, %v2139
    %v2180 = vadd.f32 %v1794, %v2141
    %v2181 = vadd.f32 %v1799, %v2143
    %v2182 = vadd.f32 %v1804, %v2145
    %v2183 = vadd.f32 %v1809, %v2147
    %v2184 = vadd.f32 %v1814, %v2149
    %v2185 = vadd.f32 %v1819, %v2151
    %v2186 = vadd.f32 %v1824, %v2153
    %v2187 = vadd.f32 %v1829, %v2155
    %v2188 = vadd.f32 %v1834, %v2157
    %v2189 = vadd.f32 %v1839, %v2159
    %v2190 = vadd.f32 %v1844, %v2161
    %v2191 = vadd.f32 %v1849, %v2163
    %2206 = vrot.lane.b32.xlu0 %v1919, 32
    %v2207 = vpop.permute.xlu0 %2206
    %2208 = vrot.lane.b32.xlu0 %v1924, 32
    %v2209 = vpop.permute.xlu0 %2208
    %2210 = vrot.lane.b32.xlu0 %v1929, 32
    %v2211 = vpop.permute.xlu0 %2210
    %2212 = vrot.lane.b32.xlu0 %v1934, 32
    %v2213 = vpop.permute.xlu0 %2212
    %2214 = vrot.lane.b32.xlu0 %v1939, 32
    %v2215 = vpop.permute.xlu0 %2214
    %2216 = vrot.lane.b32.xlu0 %v1944, 32
    %v2217 = vpop.permute.xlu0 %2216
    %2218 = vrot.lane.b32.xlu0 %v1949, 32
    %v2219 = vpop.permute.xlu0 %2218
    %2220 = vrot.lane.b32.xlu0 %v1954, 32
    %v2221 = vpop.permute.xlu0 %2220
    %2222 = vrot.lane.b32.xlu0 %v1959, 32
    %v2223 = vpop.permute.xlu0 %2222
    %2224 = vrot.lane.b32.xlu0 %v1964, 32
    %v2225 = vpop.permute.xlu0 %2224
    %2226 = vrot.lane.b32.xlu0 %v1969, 32
    %v2227 = vpop.permute.xlu0 %2226
    %2228 = vrot.lane.b32.xlu0 %v1974, 32
    %v2229 = vpop.permute.xlu0 %2228
    %2230 = vrot.lane.b32.xlu0 %v1979, 32
    %v2231 = vpop.permute.xlu0 %2230
    %2232 = vrot.lane.b32.xlu0 %v1984, 32
    %v2233 = vpop.permute.xlu0 %2232
    %v2248 = vadd.f32 %v2178, %v2207
    %v2249 = vadd.f32 %v2179, %v2209
    %v2250 = vadd.f32 %v2180, %v2211
    %v2251 = vadd.f32 %v2181, %v2213
    %v2252 = vadd.f32 %v2182, %v2215
    %v2253 = vadd.f32 %v2183, %v2217
    %v2254 = vadd.f32 %v2184, %v2219
    %v2255 = vadd.f32 %v2185, %v2221
    %v2256 = vadd.f32 %v2186, %v2223
    %v2257 = vadd.f32 %v2187, %v2225
    %v2258 = vadd.f32 %v2188, %v2227
    %v2259 = vadd.f32 %v2189, %v2229
    %v2260 = vadd.f32 %v2190, %v2231
    %v2261 = vadd.f32 %v2191, %v2233
    %s2262 = scalar_lea.vmem %s15, 1
    %v2263 = vld [vmem:[%s2262] sm:$0x1]
    %s2264 = scalar_lea.vmem %s16, 1
    %v2265 = vld [vmem:[%s2264] sm:$0x1]
    %v2266 = vsel %vm313, %v2248, 0.0
    %v2267 = vsel %vm313, %v2249, 0.0
    %v2268 = vadd.f32 %v2266, %v2267
    %v2269 = vsel %vm313, %v2250, 0.0
    %v2270 = vadd.f32 %v2268, %v2269
    %v2271 = vsel %vm313, %v2251, 0.0
    %v2272 = vadd.f32 %v2270, %v2271
    %v2273 = vsel %vm313, %v2252, 0.0
    %v2274 = vadd.f32 %v2272, %v2273
    %v2275 = vsel %vm313, %v2253, 0.0
    %v2276 = vadd.f32 %v2274, %v2275
    %v2277 = vsel %vm313, %v2254, 0.0
    %v2278 = vadd.f32 %v2276, %v2277
    %v2279 = vsel %vm313, %v2255, 0.0
    %v2280 = vadd.f32 %v2278, %v2279
    %v2281 = vsel %vm313, %v2256, 0.0
    %v2282 = vadd.f32 %v2280, %v2281
    %v2283 = vsel %vm313, %v2257, 0.0
    %v2284 = vadd.f32 %v2282, %v2283
    %v2285 = vsel %vm313, %v2258, 0.0
    %v2286 = vadd.f32 %v2284, %v2285
    %v2287 = vsel %vm313, %v2259, 0.0
    %v2288 = vadd.f32 %v2286, %v2287
    %v2289 = vsel %vm313, %v2260, 0.0
    %v2290 = vadd.f32 %v2288, %v2289
    %v2291 = vsel %vm313, %v2261, 0.0
    %v2292 = vadd.f32 %v2290, %v2291
    %v2293 = vrot.slane %v2292, 4
    %v2294 = vadd.f32 %v2292, %v2293
    %v2295 = vrot.slane %v2294, 2
    %v2296 = vadd.f32 %v2294, %v2295
    %v2297 = vrot.slane %v2296, 1
    %v2298 = vadd.f32 %v2296, %v2297
    %v2299 = vmul.f32 %v2298, %v1420
    %v2300 = vsub.f32 %v2248, %v2299
    %v2301 = vsub.f32 %v2249, %v2299
    %v2302 = vsub.f32 %v2250, %v2299
    %v2303 = vsub.f32 %v2251, %v2299
    %v2304 = vsub.f32 %v2252, %v2299
    %v2305 = vsub.f32 %v2253, %v2299
    %v2306 = vsub.f32 %v2254, %v2299
    %v2307 = vsub.f32 %v2255, %v2299
    %v2308 = vsub.f32 %v2256, %v2299
    %v2309 = vsub.f32 %v2257, %v2299
    %v2310 = vsub.f32 %v2258, %v2299
    %v2311 = vsub.f32 %v2259, %v2299
    %v2312 = vsub.f32 %v2260, %v2299
    %v2313 = vsub.f32 %v2261, %v2299
    %v2314 = vmul.f32 %v2300, %v2300
    %v2315 = vmul.f32 %v2301, %v2301
    %v2316 = vmul.f32 %v2302, %v2302
    %v2317 = vmul.f32 %v2303, %v2303
    %v2318 = vmul.f32 %v2304, %v2304
    %v2319 = vmul.f32 %v2305, %v2305
    %v2320 = vmul.f32 %v2306, %v2306
    %v2321 = vmul.f32 %v2307, %v2307
    %v2322 = vmul.f32 %v2308, %v2308
    %v2323 = vmul.f32 %v2309, %v2309
    %v2324 = vmul.f32 %v2310, %v2310
    %v2325 = vmul.f32 %v2311, %v2311
    %v2326 = vmul.f32 %v2312, %v2312
    %v2327 = vmul.f32 %v2313, %v2313
    %v2328 = vsel %vm313, %v2314, 0.0
    %v2329 = vsel %vm313, %v2315, 0.0
    %v2330 = vadd.f32 %v2328, %v2329
    %v2331 = vsel %vm313, %v2316, 0.0
    %v2332 = vadd.f32 %v2330, %v2331
    %v2333 = vsel %vm313, %v2317, 0.0
    %v2334 = vadd.f32 %v2332, %v2333
    %v2335 = vsel %vm313, %v2318, 0.0
    %v2336 = vadd.f32 %v2334, %v2335
    %v2337 = vsel %vm313, %v2319, 0.0
    %v2338 = vadd.f32 %v2336, %v2337
    %v2339 = vsel %vm313, %v2320, 0.0
    %v2340 = vadd.f32 %v2338, %v2339
    %v2341 = vsel %vm313, %v2321, 0.0
    %v2342 = vadd.f32 %v2340, %v2341
    %v2343 = vsel %vm313, %v2322, 0.0
    %v2344 = vadd.f32 %v2342, %v2343
    %v2345 = vsel %vm313, %v2323, 0.0
    %v2346 = vadd.f32 %v2344, %v2345
    %v2347 = vsel %vm313, %v2324, 0.0
    %v2348 = vadd.f32 %v2346, %v2347
    %v2349 = vsel %vm313, %v2325, 0.0
    %v2350 = vadd.f32 %v2348, %v2349
    %v2351 = vsel %vm313, %v2326, 0.0
    %v2352 = vadd.f32 %v2350, %v2351
    %v2353 = vsel %vm313, %v2327, 0.0
    %v2354 = vadd.f32 %v2352, %v2353
    %v2355 = vrot.slane %v2354, 4
    %v2356 = vadd.f32 %v2354, %v2355
    %v2357 = vrot.slane %v2356, 2
    %v2358 = vadd.f32 %v2356, %v2357
    %v2359 = vrot.slane %v2358, 1
    %v2360 = vadd.f32 %v2358, %v2359
    %v2361 = vmul.f32 %v2360, %v1420
    %v2362 = vadd.f32 %v2361, 1e-05
    %v2363 = vrsqrt.pop %v2362
    %v2364 = vmul.f32 %v2300, %v2363
    %v2365 = vmul.f32 %v2301, %v2363
    %v2366 = vmul.f32 %v2302, %v2363
    %v2367 = vmul.f32 %v2303, %v2363
    %v2368 = vmul.f32 %v2304, %v2363
    %v2369 = vmul.f32 %v2305, %v2363
    %v2370 = vmul.f32 %v2306, %v2363
    %v2371 = vmul.f32 %v2307, %v2363
    %v2372 = vmul.f32 %v2308, %v2363
    %v2373 = vmul.f32 %v2309, %v2363
    %v2374 = vmul.f32 %v2310, %v2363
    %v2375 = vmul.f32 %v2311, %v2363
    %v2376 = vmul.f32 %v2312, %v2363
    %v2377 = vmul.f32 %v2313, %v2363
    %v2379 = vlaneseq
    %v2380 = vshrl.u32 %v2379, 7
    %v2381 = vsub.s32 0, %v2380
    %v2382 = vrot.slane %v2263, %v2381
    %v2384 = vmul.f32 %v2364, %v2382
    %v2385 = vmul.f32 %v2365, %v2382
    %v2386 = vmul.f32 %v2366, %v2382
    %v2387 = vmul.f32 %v2367, %v2382
    %v2388 = vmul.f32 %v2368, %v2382
    %v2389 = vmul.f32 %v2369, %v2382
    %v2390 = vmul.f32 %v2370, %v2382
    %v2391 = vmul.f32 %v2371, %v2382
    %v2392 = vmul.f32 %v2372, %v2382
    %v2393 = vmul.f32 %v2373, %v2382
    %v2394 = vmul.f32 %v2374, %v2382
    %v2395 = vmul.f32 %v2375, %v2382
    %v2396 = vmul.f32 %v2376, %v2382
    %v2397 = vmul.f32 %v2377, %v2382
    %v2399 = vlaneseq
    %v2400 = vshrl.u32 %v2399, 7
    %v2401 = vsub.s32 0, %v2400
    %v2402 = vrot.slane %v2265, %v2401
    %v2404 = vadd.f32 %v2384, %v2402
    %v2405 = vadd.f32 %v2385, %v2402
    %v2406 = vadd.f32 %v2386, %v2402
    %v2407 = vadd.f32 %v2387, %v2402
    %v2408 = vadd.f32 %v2388, %v2402
    %v2409 = vadd.f32 %v2389, %v2402
    %v2410 = vadd.f32 %v2390, %v2402
    %v2411 = vadd.f32 %v2391, %v2402
    %v2412 = vadd.f32 %v2392, %v2402
    %v2413 = vadd.f32 %v2393, %v2402
    %v2414 = vadd.f32 %v2394, %v2402
    %v2415 = vadd.f32 %v2395, %v2402
    %v2416 = vadd.f32 %v2396, %v2402
    %v2417 = vadd.f32 %v2397, %v2402
    %v2418 = vmax.f32 %v2404, 0.0
    %v2419 = vmax.f32 %v2405, 0.0
    %v2420 = vmax.f32 %v2406, 0.0
    %v2421 = vmax.f32 %v2407, 0.0
    %v2422 = vmax.f32 %v2408, 0.0
    %v2423 = vmax.f32 %v2409, 0.0
    %v2424 = vmax.f32 %v2410, 0.0
    %v2425 = vmax.f32 %v2411, 0.0
    %v2426 = vmax.f32 %v2412, 0.0
    %v2427 = vmax.f32 %v2413, 0.0
    %v2428 = vmax.f32 %v2414, 0.0
    %v2429 = vmax.f32 %v2415, 0.0
    %v2430 = vmax.f32 %v2416, 0.0
    %v2431 = vmax.f32 %v2417, 0.0
    %v2432 = vadd.f32 %v1554, %v2418
    %v2433 = vadd.f32 %v1555, %v2419
    %v2434 = vadd.f32 %v1556, %v2420
    %v2435 = vadd.f32 %v1557, %v2421
    %v2436 = vadd.f32 %v1558, %v2422
    %v2437 = vadd.f32 %v1559, %v2423
    %v2438 = vadd.f32 %v1560, %v2424
    %v2439 = vadd.f32 %v1561, %v2425
    %v2440 = vadd.f32 %v1562, %v2426
    %v2441 = vadd.f32 %v1563, %v2427
    %v2442 = vadd.f32 %v1564, %v2428
    %v2443 = vadd.f32 %v1565, %v2429
    %v2444 = vadd.f32 %v1566, %v2430
    %v2445 = vadd.f32 %v1567, %v2431
    %2446 = vst.msk [vmem:[%s17] sm:$0xff] %vm313, %v2432
    %2447 = vst.msk [vmem:[%s17 + $0x8] sm:$0xff] %vm313, %v2433
    %2448 = vst.msk [vmem:[%s17 + $0x10] sm:$0xff] %vm313, %v2434
    %2449 = vst.msk [vmem:[%s17 + $0x18] sm:$0xff] %vm313, %v2435
    %2450 = vst.msk [vmem:[%s17 + $0x20] sm:$0xff] %vm313, %v2436
    %2451 = vst.msk [vmem:[%s17 + $0x28] sm:$0xff] %vm313, %v2437
    %2452 = vst.msk [vmem:[%s17 + $0x30] sm:$0xff] %vm313, %v2438
    %2453 = vst.msk [vmem:[%s17 + $0x38] sm:$0xff] %vm313, %v2439
    %2454 = vst.msk [vmem:[%s17 + $0x40] sm:$0xff] %vm313, %v2440
    %2455 = vst.msk [vmem:[%s17 + $0x48] sm:$0xff] %vm313, %v2441
    %2456 = vst.msk [vmem:[%s17 + $0x50] sm:$0xff] %vm313, %v2442
    %2457 = vst.msk [vmem:[%s17 + $0x58] sm:$0xff] %vm313, %v2443
    %2458 = vst.msk [vmem:[%s17 + $0x60] sm:$0xff] %vm313, %v2444
    %2459 = vst.msk [vmem:[%s17 + $0x68] sm:$0xff] %vm313, %v2445
    %v2460 = vld [vmem:[%s4] sm:$0xff]
    %v2461 = vld [vmem:[%s4 + $0x8] sm:$0xff]
    %v2463 = vsel %vm1124, %v2460, 0
    %v2466 = vsel %vm1124, %v2461, 0
    %2468 = vmatprep.subr.mxu0 0.0
    %2469 = vmatpush1.msra.mxu0 %v2432
    %2470 = vmatprep.subr.mxu0 0.0
    %2471 = vmatpush1.msra.mxu0 %v2433
    %2472 = vmatprep.subr.mxu0 0.0
    %2473 = vmatpush1.msra.mxu0 %v2434
    %2474 = vmatprep.subr.mxu0 0.0
    %2475 = vmatpush1.msra.mxu0 %v2435
    %2476 = vmatprep.subr.mxu0 0.0
    %2477 = vmatpush1.msra.mxu0 %v2436
    %2478 = vmatprep.subr.mxu0 0.0
    %2479 = vmatpush1.msra.mxu0 %v2437
    %2480 = vmatprep.subr.mxu0 0.0
    %2481 = vmatpush1.msra.mxu0 %v2438
    %2482 = vmatprep.subr.mxu0 0.0
    %2483 = vmatpush1.msra.mxu0 %v2439
    %2484 = vmatprep.subr.mxu0 0.0
    %2485 = vmatpush1.msra.mxu0 %v2440
    %2486 = vmatprep.subr.mxu0 0.0
    %2487 = vmatpush1.msra.mxu0 %v2441
    %2488 = vmatprep.subr.mxu0 0.0
    %2489 = vmatpush1.msra.mxu0 %v2442
    %2490 = vmatprep.subr.mxu0 0.0
    %2491 = vmatpush1.msra.mxu0 %v2443
    %2492 = vmatprep.subr.mxu0 0.0
    %2493 = vmatpush1.msra.mxu0 %v2444
    %2494 = vmatprep.subr.mxu0 0.0
    %2495 = vmatpush1.msra.mxu0 %v2445
    %2496 = vmatprep.subr.mxu0 0.0
    %2497 = vmatpush1.msra.mxu0 0.0
    %2498 = vmatprep.subr.mxu0 0.0
    %2499 = vmatpush1.msra.mxu0 0.0
    %2500 = vmatprep.subr.mxu0 0.0
    %2501 = vmatpush1.msra.mxu0 0.0
    %2502 = vmatprep.subr.mxu0 0.0
    %2503 = vmatpush1.msra.mxu0 0.0
    %2504 = vmatprep.subr.mxu0 0.0
    %2505 = vmatpush1.msra.mxu0 0.0
    %2506 = vmatprep.subr.mxu0 0.0
    %2507 = vmatpush1.msra.mxu0 0.0
    %2508 = vmatprep.subr.mxu0 0.0
    %2509 = vmatpush1.msra.mxu0 0.0
    %2510 = vmatprep.subr.mxu0 0.0
    %2511 = vmatpush1.msra.mxu0 0.0
    %2512 = vmatprep.subr.mxu0 0.0
    %2513 = vmatpush1.msra.mxu0 0.0
    %2514 = vmatprep.subr.mxu0 0.0
    %2515 = vmatpush1.msra.mxu0 0.0
    %2516 = vmatprep.subr.mxu0 0.0
    %2517 = vmatpush1.msra.mxu0 0.0
    %2518 = vmatprep.subr.mxu0 0.0
    %2519 = vmatpush1.msra.mxu0 0.0
    %2520 = vmatprep.subr.mxu0 0.0
    %2521 = vmatpush1.msra.mxu0 0.0
    %2522 = vmatprep.subr.mxu0 0.0
    %2523 = vmatpush1.msra.mxu0 0.0
    %2524 = vmatprep.subr.mxu0 0.0
    %2525 = vmatpush1.msra.mxu0 0.0
    %2526 = vmatprep.subr.mxu0 0.0
    %2527 = vmatpush1.msra.mxu0 0.0
    %2528 = vmatprep.subr.mxu0 0.0
    %2529 = vmatpush1.msra.mxu0 0.0
    %2530 = vmatprep.subr.mxu0 0.0
    %2531 = vmatpush1.msra.mxu0 0.0
    %2532 = vmatprep.mubr.f32.mxu0 0.0
    %2533 = vmatmul.mubr.f32.gmra.mrb[0].mxu0 %v2463
    %v2534 = vpop.f32.mrb[0].mxu0
    %v2535 = vadd.f32 0.0, %v2534
    %v2536 = vpop.f32.mrb[0].mxu0
    %2537 = vmatprep.mubr.f32.mxu0 0.0
    %2538 = vmatmul.mubr.f32.gmra.mrb[0].mxu0 %v2466
    %v2539 = vpop.f32.mrb[0].mxu0
    %v2540 = vadd.f32 0.0, %v2539
    %v2541 = vpop.f32.mrb[0].mxu0
    %2542 = vdwg.mxu0
    %2543 = vst.msk [vmem:[#allocation2] sm:$0xff] %vm313, %v2535
    %2544 = vst.msk [vmem:[#allocation2 + $0x8] sm:$0xff] %vm313, %v2540
    // Predicated region
    $region70: #{forward.1} parent=1 // pred_check
      _
    $region71: #{forward.1} parent=1 // pred_check_branch
      %2546 = sbr.rel (0) target = $region73
    $region72: #{forward.1} parent=1 // pred_region
      _
    $region73: #{forward.1} parent=1 // pred_fallthru
      _
    // Predicated region
    $region74: #{forward.1} parent=1 // pred_check
      _
    $region75: #{forward.1} parent=1 // pred_check_branch
      %2548 = sbr.rel (0) target = $region77
    $region76: #{forward.1} parent=1 // pred_region
      %s2550 = ssub.s32 256, 256
      %2551 = vsyncadd [#allocation3], %s2550
      %s2552 = sshll.u32 [#allocation2], 4
      %s2553 = int_to_ptr.vmem [resolvable:$true] %s2552
      %2558 = dma.vmem_to_hbm [thread:$0]  %s2553, 256, %s18, [#allocation3], 128, 128, 8
    $region77: #{forward.1} parent=1 // pred_fallthru
      _
    // Predicated region
    $region78: #{forward.1} parent=1 // pred_check
      _
    $region79: #{forward.1} parent=1 // pred_check_branch
      %2560 = sbr.rel (0) target = $region81
    $region80: #{forward.1} parent=1 // pred_region
      _
    $region81: #{forward.1} parent=1 // pred_fallthru
      _
    // Predicated region
    $region82: #{forward.1} parent=1 // pred_check
      _
    $region83: #{forward.1} parent=1 // pred_check_branch
      %2562 = sbr.rel (0) target = $region85
    $region84: #{forward.1} parent=1 // pred_region
      %2563 = dma.done [#allocation3], 256
    $region85: #{forward.1} parent=1 // pred_fallthru
      _
    %2564 = vsyncpa [#allocation3], 1

</llo_original>
